<compile_context>
chip_gen: v6e
topology: v6e:2x2x1
jax: 0.10.0
libtpu: 0.0.40
codegen_flags: <defaults>
</compile_context>

<pallas_src>
import functools

import jax
import jax.numpy as jnp
from jax.experimental import pallas as pl
from jax.experimental.pallas import tpu as pltpu

NEG_INF = -1e30            # finite stand-in for -inf keeps softmax NaN-free
_VMEM_LIMIT = 48 * 1024 * 1024   # raised scoped VMEM; safe on v5e/v6e/v7x


def _cparams(sem):
    return pltpu.CompilerParams(dimension_semantics=sem,
                                vmem_limit_bytes=_VMEM_LIMIT)


def _row_tile(m, pref=512):
    """Largest multiple-of-8 divisor of m that is <= pref (else the full m)."""
    t = min(pref, m)
    t -= t % 8
    while t >= 8:
        if m % t == 0:
            return t
        t -= 8
    return m


def _col_tile(n, pref=512):
    """Largest multiple-of-128 divisor of n that is <= pref (else the full n)."""
    t = min(pref, n)
    t -= t % 128
    while t >= 128:
        if n % t == 0:
            return t
        t -= 128
    return n


def _heads_per_block(num_heads, head_dim):
    """How many heads to pack into one 128-lane attention block."""
    hpb = max(1, 128 // head_dim) if 128 % head_dim == 0 else 1
    hpb = min(hpb, num_heads)
    while num_heads % hpb:
        hpb -= 1
    return hpb


def _ln(y, g, b):
    mu = jnp.mean(y, axis=-1, keepdims=True)
    var = jnp.mean((y - mu) ** 2, axis=-1, keepdims=True)
    return (y - mu) * jax.lax.rsqrt(var + 1e-5) * g + b


# --------------------------------------------------------------------------
# Pallas kernels
# --------------------------------------------------------------------------
def _ln_linear_kernel(x_ref, g_ref, b_ref, w_ref, bias_ref, xln_ref, y_ref):
    """xln = LN(x); y = xln @ W + bias  (embedding LN fused with QKV proj)."""
    xln = _ln(x_ref[...].astype(jnp.float32), g_ref[...], b_ref[...])
    xln_bf = xln.astype(jnp.bfloat16)
    xln_ref[...] = xln_bf
    y = jnp.dot(xln_bf, w_ref[...].astype(jnp.bfloat16),
                preferred_element_type=jnp.float32) + bias_ref[...]
    y_ref[...] = y.astype(y_ref.dtype)


def ln_linear(x2d, g, b, w, bias):
    m, h = x2d.shape
    n = w.shape[1]
    tm = _row_tile(m)
    return pl.pallas_call(
        _ln_linear_kernel,
        grid=(m // tm,),
        in_specs=[
            pl.BlockSpec((tm, h), lambda i: (i, 0)),
            pl.BlockSpec((1, h), lambda i: (0, 0)),
            pl.BlockSpec((1, h), lambda i: (0, 0)),
            pl.BlockSpec((h, n), lambda i: (0, 0)),
            pl.BlockSpec((1, n), lambda i: (0, 0)),
        ],
        out_specs=[
            pl.BlockSpec((tm, h), lambda i: (i, 0)),
            pl.BlockSpec((tm, n), lambda i: (i, 0)),
        ],
        out_shape=[
            jax.ShapeDtypeStruct((m, h), jnp.bfloat16),
            jax.ShapeDtypeStruct((m, n), jnp.bfloat16),
        ],
        compiler_params=_cparams(("parallel",)),
    )(x2d, g.reshape(1, h), b.reshape(1, h), w, bias.reshape(1, n))


def _linear_kernel(x_ref, w_ref, b_ref, o_ref):
    x = x_ref[...].astype(jnp.bfloat16)
    w = w_ref[...].astype(jnp.bfloat16)
    y = jnp.dot(x, w, preferred_element_type=jnp.float32) + b_ref[...]
    o_ref[...] = y.astype(o_ref.dtype)


def linear(x2d, w, b, out_dtype=jnp.bfloat16):
    """y = x @ W + b, tiled over rows; weight block stays resident."""
    m, k = x2d.shape
    n = w.shape[1]
    tm = _row_tile(m)
    return pl.pallas_call(
        _linear_kernel,
        grid=(m // tm,),
        in_specs=[
            pl.BlockSpec((tm, k), lambda i: (i, 0)),
            pl.BlockSpec((k, n), lambda i: (0, 0)),
            pl.BlockSpec((1, n), lambda i: (0, 0)),
        ],
        out_specs=pl.BlockSpec((tm, n), lambda i: (i, 0)),
        out_shape=jax.ShapeDtypeStruct((m, n), out_dtype),
        compiler_params=_cparams(("parallel",)),
    )(x2d, w, b.reshape(1, n))


def _proj_res_ln_linear_kernel(x_ref, w_ref, b_ref, r_ref, g_ref, beta_ref,
                               w2_ref, b2_ref, xln_ref, y_ref):
    """xln = LN(x@W + b + r); y = xln @ W2 + b2  (out-proj + LN + next proj)."""
    y0 = jnp.dot(x_ref[...].astype(jnp.bfloat16), w_ref[...].astype(jnp.bfloat16),
                 preferred_element_type=jnp.float32)
    y0 = y0 + b_ref[...] + r_ref[...].astype(jnp.float32)
    xln_bf = _ln(y0, g_ref[...], beta_ref[...]).astype(jnp.bfloat16)
    xln_ref[...] = xln_bf
    y_ref[...] = (jnp.dot(xln_bf, w2_ref[...].astype(jnp.bfloat16),
                          preferred_element_type=jnp.float32)
                  + b2_ref[...]).astype(y_ref.dtype)


def linear_residual_ln_linear(x2d, w, b, residual2d, g, beta, w2, b2):
    m, k = x2d.shape
    n = w.shape[1]
    n2 = w2.shape[1]
    tm = _row_tile(m)
    return pl.pallas_call(
        _proj_res_ln_linear_kernel,
        grid=(m // tm,),
        in_specs=[
            pl.BlockSpec((tm, k), lambda i: (i, 0)),
            pl.BlockSpec((k, n), lambda i: (0, 0)),
            pl.BlockSpec((1, n), lambda i: (0, 0)),
            pl.BlockSpec((tm, n), lambda i: (i, 0)),
            pl.BlockSpec((1, n), lambda i: (0, 0)),
            pl.BlockSpec((1, n), lambda i: (0, 0)),
            pl.BlockSpec((n, n2), lambda i: (0, 0)),
            pl.BlockSpec((1, n2), lambda i: (0, 0)),
        ],
        out_specs=[
            pl.BlockSpec((tm, n), lambda i: (i, 0)),
            pl.BlockSpec((tm, n2), lambda i: (i, 0)),
        ],
        out_shape=[
            jax.ShapeDtypeStruct((m, n), jnp.bfloat16),
            jax.ShapeDtypeStruct((m, n2), jnp.bfloat16),
        ],
        compiler_params=_cparams(("parallel",)),
    )(x2d, w, b.reshape(1, n), residual2d, g.reshape(1, n), beta.reshape(1, n),
      w2, b2.reshape(1, n2))


def _linear_res_ln_kernel(x_ref, w_ref, b_ref, r_ref, g_ref, beta_ref, o_ref):
    y = jnp.dot(x_ref[...].astype(jnp.bfloat16), w_ref[...].astype(jnp.bfloat16),
                preferred_element_type=jnp.float32)
    y = y + b_ref[...] + r_ref[...].astype(jnp.float32)
    o_ref[...] = _ln(y, g_ref[...], beta_ref[...]).astype(o_ref.dtype)


def linear_residual_ln(x2d, w, b, residual2d, g, beta, out_dtype=jnp.bfloat16):
    """LN((x @ W + b) + residual) fused in one kernel."""
    m, k = x2d.shape
    n = w.shape[1]
    tm = _row_tile(m)
    return pl.pallas_call(
        _linear_res_ln_kernel,
        grid=(m // tm,),
        in_specs=[
            pl.BlockSpec((tm, k), lambda i: (i, 0)),
            pl.BlockSpec((k, n), lambda i: (0, 0)),
            pl.BlockSpec((1, n), lambda i: (0, 0)),
            pl.BlockSpec((tm, n), lambda i: (i, 0)),
            pl.BlockSpec((1, n), lambda i: (0, 0)),
            pl.BlockSpec((1, n), lambda i: (0, 0)),
        ],
        out_specs=pl.BlockSpec((tm, n), lambda i: (i, 0)),
        out_shape=jax.ShapeDtypeStruct((m, n), out_dtype),
        compiler_params=_cparams(("parallel",)),
    )(x2d, w, b.reshape(1, n), residual2d, g.reshape(1, n), beta.reshape(1, n))


def _ffn_kernel(x_ref, w1_ref, b1_ref, w2_ref, b2_ref, g_ref, beta_ref,
                o_ref, acc_ref):
    """LN(gelu(x@W1+b1)@W2 + b2 + x), chunked over the FFN dimension."""
    j = pl.program_id(1)

    @pl.when(j == 0)
    def _():
        acc_ref[...] = jnp.zeros_like(acc_ref)

    x = x_ref[...].astype(jnp.bfloat16)
    hmid = jnp.dot(x, w1_ref[...].astype(jnp.bfloat16),
                   preferred_element_type=jnp.float32) + b1_ref[...]
    # TODO(synk): HF BART uses exact (erf) GELU; tanh approximation used here.
    hmid = jax.nn.gelu(hmid, approximate=True)
    acc_ref[...] += jnp.dot(hmid.astype(jnp.bfloat16),
                            w2_ref[...].astype(jnp.bfloat16),
                            preferred_element_type=jnp.float32)

    @pl.when(j == pl.num_programs(1) - 1)
    def _():
        y = acc_ref[...] + b2_ref[...] + x_ref[...].astype(jnp.float32)
        o_ref[...] = _ln(y, g_ref[...], beta_ref[...]).astype(o_ref.dtype)


def ffn_block(x2d, w1, b1, w2, b2, g, beta):
    m, h = x2d.shape
    f = w1.shape[1]
    tm = _row_tile(m)
    tf = _col_tile(f, 512)
    return pl.pallas_call(
        _ffn_kernel,
        grid=(m // tm, f // tf),
        in_specs=[
            pl.BlockSpec((tm, h), lambda i, j: (i, 0)),
            pl.BlockSpec((h, tf), lambda i, j: (0, j)),
            pl.BlockSpec((1, tf), lambda i, j: (0, j)),
            pl.BlockSpec((tf, h), lambda i, j: (j, 0)),
            pl.BlockSpec((1, h), lambda i, j: (0, 0)),
            pl.BlockSpec((1, h), lambda i, j: (0, 0)),
            pl.BlockSpec((1, h), lambda i, j: (0, 0)),
        ],
        out_specs=pl.BlockSpec((tm, h), lambda i, j: (i, 0)),
        out_shape=jax.ShapeDtypeStruct((m, h), jnp.float32),
        scratch_shapes=[pltpu.VMEM((tm, h), jnp.float32)],
        compiler_params=_cparams(("parallel", "arbitrary")),
    )(x2d, w1, b1.reshape(1, f), w2, b2.reshape(1, h),
      g.reshape(1, h), beta.reshape(1, h))


def _self_attn_kernel(q_ref, k_ref, v_ref, pad_ref, o_ref,
                      *, tq, head_dim, heads, scale):
    # q: (tq, heads*hd) bf16; k/v: (T, heads*hd) bf16; pad: (1, T) int32.
    qi = pl.program_id(2)
    t_full = k_ref.shape[0]
    rows = qi * tq + jax.lax.broadcasted_iota(jnp.int32, (tq, t_full), 0)
    cols = jax.lax.broadcasted_iota(jnp.int32, (tq, t_full), 1)
    invalid = jnp.logical_or(cols > rows, pad_ref[...] != 0)   # causal | pad
    q_all, k_all, v_all = q_ref[...], k_ref[...], v_ref[...]
    ctxs = []
    for hh in range(heads):
        lo = hh * head_dim
        q = (q_all[:, lo:lo + head_dim].astype(jnp.float32) * scale
             ).astype(jnp.bfloat16)                            # pre-scaled q
        k = k_all[:, lo:lo + head_dim]
        v = v_all[:, lo:lo + head_dim]
        s = jax.lax.dot_general(q, k, (((1,), (1,)), ((), ())),
                                preferred_element_type=jnp.float32)
        s = jnp.where(invalid, NEG_INF, s)
        s = s - jnp.max(s, axis=-1, keepdims=True)
        e = jnp.exp(s)
        p = e * pl.reciprocal(jnp.sum(e, axis=-1, keepdims=True), approx=True)
        ctxs.append(jnp.dot(p.astype(jnp.bfloat16), v,
                            preferred_element_type=jnp.float32))
    ctx = ctxs[0] if len(ctxs) == 1 else jnp.concatenate(ctxs, axis=-1)
    o_ref[...] = ctx.astype(o_ref.dtype)                       # lane-dense store


def self_attention(qkv, dec_pad, num_heads, scale):
    b, t, three_h = qkv.shape
    h = three_h // 3
    hd = h // num_heads
    hpb = _heads_per_block(num_heads, hd)      # heads packed per 128-lane block
    nhb = num_heads // hpb
    w = hpb * hd
    tq = _row_tile(t, 256)
    kernel = functools.partial(_self_attn_kernel, tq=tq, head_dim=hd,
                               heads=hpb, scale=scale)
    return pl.pallas_call(
        kernel,
        grid=(b, nhb, t // tq),
        in_specs=[
            pl.BlockSpec((None, tq, w), lambda bi, p, qi: (bi, qi, p)),            # Q
            pl.BlockSpec((None, t, w), lambda bi, p, qi: (bi, 0, nhb + p)),        # K
            pl.BlockSpec((None, t, w), lambda bi, p, qi: (bi, 0, 2 * nhb + p)),    # V
            pl.BlockSpec((None, 1, t), lambda bi, p, qi: (bi, 0, 0)),              # pad
        ],
        out_specs=pl.BlockSpec((None, tq, w), lambda bi, p, qi: (bi, qi, p)),
        out_shape=jax.ShapeDtypeStruct((b, t, h), jnp.bfloat16),
        compiler_params=_cparams(("parallel", "parallel", "parallel")),
    )(qkv, qkv, qkv, dec_pad)


def _cross_attn_kernel(q_ref, k_ref, v_ref, pad_ref, o_ref, p_ref,
                       *, head_dim, heads, scale):
    # q: (tq, heads*hd) bf16; k/v: (S, heads*hd) bf16; pad: (1, S) int32.
    invalid = pad_ref[...] != 0
    q_all, k_all, v_all = q_ref[...], k_ref[...], v_ref[...]
    ctxs = []
    for hh in range(heads):
        lo = hh * head_dim
        q = (q_all[:, lo:lo + head_dim].astype(jnp.float32) * scale
             ).astype(jnp.bfloat16)
        k = k_all[:, lo:lo + head_dim]
        v = v_all[:, lo:lo + head_dim]
        s = jax.lax.dot_general(q, k, (((1,), (1,)), ((), ())),
                                preferred_element_type=jnp.float32)
        s = jnp.where(invalid, NEG_INF, s)
        s = s - jnp.max(s, axis=-1, keepdims=True)
        e = jnp.exp(s)
        p = e / jnp.sum(e, axis=-1, keepdims=True)   # exact: probs are returned
        p_ref[hh] = p.astype(p_ref.dtype)
        ctxs.append(jnp.dot(p.astype(jnp.bfloat16), v,
                            preferred_element_type=jnp.float32))
    ctx = ctxs[0] if len(ctxs) == 1 else jnp.concatenate(ctxs, axis=-1)
    o_ref[...] = ctx.astype(o_ref.dtype)


def cross_attention(q, kv, enc_pad, num_heads, scale):
    b, t, h = q.shape
    s = kv.shape[1]
    hd = h // num_heads
    hpb = _heads_per_block(num_heads, hd)
    nhb = num_heads // hpb
    w = hpb * hd
    tq = _row_tile(t, 256)
    kernel = functools.partial(_cross_attn_kernel, head_dim=hd,
                               heads=hpb, scale=scale)
    out, probs = pl.pallas_call(
        kernel,
        grid=(b, nhb, t // tq),
        in_specs=[
            pl.BlockSpec((None, tq, w), lambda bi, p, qi: (bi, qi, p)),        # Q
            pl.BlockSpec((None, s, w), lambda bi, p, qi: (bi, 0, p)),          # K
            pl.BlockSpec((None, s, w), lambda bi, p, qi: (bi, 0, nhb + p)),    # V
            pl.BlockSpec((None, 1, s), lambda bi, p, qi: (bi, 0, 0)),          # pad
        ],
        out_specs=[
            pl.BlockSpec((None, tq, w), lambda bi, p, qi: (bi, qi, p)),
            pl.BlockSpec((None, hpb, tq, s), lambda bi, p, qi: (bi, p, qi, 0)),
        ],
        out_shape=[
            jax.ShapeDtypeStruct((b, t, h), jnp.bfloat16),
            jax.ShapeDtypeStruct((b, num_heads, t, s), jnp.float32),
        ],
        compiler_params=_cparams(("parallel", "parallel", "parallel")),
    )(q, kv, kv, enc_pad)
    return out, probs


def _copy_score_kernel(dec_ref, w_ref, enc_ref, pad_ref, o_ref):
    dec = dec_ref[...].astype(jnp.bfloat16)
    w = w_ref[...].astype(jnp.bfloat16)
    th = jnp.tanh(jnp.dot(dec, w, preferred_element_type=jnp.float32))
    enc = enc_ref[...].astype(jnp.bfloat16)
    score = jax.lax.dot_general(th.astype(jnp.bfloat16), enc,
                                (((1,), (1,)), ((), ())),
                                preferred_element_type=jnp.float32)   # (tq, S)
    score = jnp.where(pad_ref[...] != 0, NEG_INF, score)
    score = score - jnp.max(score, axis=-1, keepdims=True)
    e = jnp.exp(score)
    o_ref[...] = (e / jnp.sum(e, axis=-1, keepdims=True)).astype(o_ref.dtype)


def copy_score(dec_hidden, w, encoder_output, encoder_mask):
    b, t, h = dec_hidden.shape
    s = encoder_output.shape[1]
    pad = encoder_mask.astype(jnp.int32).reshape(b, 1, s)
    tq = _row_tile(t, 256)
    return pl.pallas_call(
        _copy_score_kernel,
        grid=(b, t // tq),
        in_specs=[
            pl.BlockSpec((None, tq, h), lambda bi, qi: (bi, qi, 0)),
            pl.BlockSpec((h, h), lambda bi, qi: (0, 0)),
            pl.BlockSpec((None, s, h), lambda bi, qi: (bi, 0, 0)),
            pl.BlockSpec((None, 1, s), lambda bi, qi: (bi, 0, 0)),
        ],
        out_specs=pl.BlockSpec((None, tq, s), lambda bi, qi: (bi, qi, 0)),
        out_shape=jax.ShapeDtypeStruct((b, t, s), jnp.float32),
        compiler_params=_cparams(("parallel", "parallel")),
    )(dec_hidden, w, encoder_output, pad)


# --------------------------------------------------------------------------
# BART-style decoder (single layer) built from the kernels above
# --------------------------------------------------------------------------
def bart_decoder_forward(params, decoder_input, encoder_hidden,
                         encoder_pad_mask, decoder_padding_mask, num_heads):
    b, t = decoder_input.shape
    s = encoder_hidden.shape[1]
    h = params["embed_tokens"].shape[1]
    hd = h // num_heads
    scale = 1.0 / (hd ** 0.5)

    # ---- embeddings (token/position gather stays in plain-JAX glue) ----
    emb = params["embed_tokens"][decoder_input] * (h ** 0.5)
    emb = emb + params["embed_positions"][:t][None]
    emb2 = emb.reshape(b * t, h)

    dec_pad = decoder_padding_mask.astype(jnp.int32).reshape(b, 1, t)
    enc_pad = encoder_pad_mask.astype(jnp.int32).reshape(b, 1, s)

    # ---- embedding LN fused with the QKV projection (x0 and qkv in one pass) ----
    x0, qkv = ln_linear(emb2, params["ln_emb_g"], params["ln_emb_b"],
                        params["sa_wqkv"], params["sa_bqkv"])

    # ---- self attention: head-pair / query-tile grid, in-kernel causal+pad ----
    ctx = self_attention(qkv.reshape(b, t, 3 * h), dec_pad, num_heads, scale)

    # ---- self-attn out-proj + residual + LN fused with the cross-attn q proj ----
    x1, q = linear_residual_ln_linear(
        ctx.reshape(b * t, h), params["sa_wo"], params["sa_bo"], x0,
        params["ln1_g"], params["ln1_b"], params["ca_wq"], params["ca_bq"])

    # ---- cross attention: fused KV projection on the encoder side ----
    kv = linear(encoder_hidden.reshape(b * s, h),
                params["ca_wkv"], params["ca_bkv"])
    ctx2, cross_probs = cross_attention(q.reshape(b, t, h),
                                        kv.reshape(b, s, 2 * h),
                                        enc_pad, num_heads, scale)
    x2 = linear_residual_ln(ctx2.reshape(b * t, h), params["ca_wo"],
                            params["ca_bo"], x1,
                            params["ln2_g"], params["ln2_b"])

    # ---- feed forward: fc1 + GELU + fc2 + residual + LN, FFN-dim chunked ----
    x3 = ffn_block(x2, params["fc1_w"], params["fc1_b"],
                   params["fc2_w"], params["fc2_b"],
                   params["ln3_g"], params["ln3_b"])

    # encoder_decoder_attention[-1] of the original -> cross-attn probs (B,NH,T,S)
    return x3.reshape(b, t, h), cross_probs


# --------------------------------------------------------------------------
# CopyBartDecoder wrapper
# --------------------------------------------------------------------------
class CopyBartDecoderPallas:
    def __init__(self, params, padding_token_id, eos_token_id, num_heads,
                 is_copy=True, coverage=False):
        self.params = params
        self.padding_token_id = padding_token_id
        self.eos_token_id = eos_token_id
        self.num_heads = num_heads
        self.is_copy = is_copy
        self.coverage = coverage
        # NOTE: the reference registers a 512x512 -inf triu buffer; the same
        # causal structure is generated in-kernel with iota compares.

    def forward(self, decoder_input, encoder_output, encoder_mask):
        # --- eos -> padding mask (token-id preprocessing, plain-JAX glue) ---
        eq = (decoder_input == self.eos_token_id).astype(jnp.int32)
        cs = jnp.cumsum(eq[:, ::-1], axis=-1)
        decoder_padding_mask = cs[:, ::-1] != cs[:, -1:]
        decoder_input = jnp.where(decoder_padding_mask, self.padding_token_id,
                                  decoder_input)

        # TODO(synk): original passes encoder_output as encoder_pad_mask (a bug)
        # and supports past_key_value incremental decoding + dropout + the
        # optional encoder_mlp; here we use a proper boolean encoder padding
        # mask and the training-mode (full causal-mask) path without dropout.
        hidden_state, cross_probs = bart_decoder_forward(
            self.params, decoder_input, encoder_output, encoder_mask,
            decoder_padding_mask, self.num_heads)

        copy_attn = cross_probs if self.is_copy else None
        return hidden_state, copy_attn

    def get_copy_score(self, decoder_hidden_state, encoder_output, encoder_mask):
        return copy_score(decoder_hidden_state, self.params["copy_w"],
                          encoder_output, encoder_mask)


# --------------------------------------------------------------------------
# deterministic parameter init (matmul weights stored bf16, MXU-native)
# --------------------------------------------------------------------------
def init_params(key, vocab, h, ffn, max_pos):
    w_shapes = {
        "embed_tokens": (vocab, h), "embed_positions": (max_pos, h),
        "sa_wqkv": (h, 3 * h), "sa_wo": (h, h),
        "ca_wq": (h, h), "ca_wkv": (h, 2 * h), "ca_wo": (h, h),
        "fc1_w": (h, ffn), "fc2_w": (ffn, h), "copy_w": (h, h),
    }
    params = {}
    keys = jax.random.split(key, len(w_shapes))
    for (name, shape), k in zip(w_shapes.items(), keys):
        w = 0.02 * jax.random.normal(k, shape, jnp.float32)
        if name not in ("embed_tokens", "embed_positions"):
            w = w.astype(jnp.bfloat16)
        params[name] = w
    for name, dim in [("sa_bqkv", 3 * h), ("sa_bo", h),
                      ("ca_bq", h), ("ca_bkv", 2 * h), ("ca_bo", h),
                      ("fc1_b", ffn), ("fc2_b", h)]:
        params[name] = jnp.zeros((dim,), jnp.float32)
    for name in ["ln_emb", "ln1", "ln2", "ln3"]:
        params[name + "_g"] = jnp.ones((h,), jnp.float32)
        params[name + "_b"] = jnp.zeros((h,), jnp.float32)
    return params


# --------------------------------------------------------------------------
if __name__ == "__main__":
    # Small but lane-aligned shapes: head_dim = 64 so a head pair is one
    # 128-lane block, and T/S are multiples of 128 for clean query tiling.
    B, T, S, H, NH, FFN, V = 2, 128, 128, 256, 4, 512, 64
    PAD_ID, EOS_ID = 1, 2

    params = init_params(jax.random.PRNGKey(0), V, H, FFN, max_pos=256)

    k1, k2 = jax.random.split(jax.random.PRNGKey(0))
    decoder_input = jax.random.randint(k1, (B, T), 3, V)
    decoder_input = decoder_input.at[:, -1].set(EOS_ID)
    decoder_input = decoder_input.at[0, 80].set(EOS_ID)   # exercise padding mask
    encoder_output = jax.random.normal(k2, (B, S, H), jnp.float32)
    encoder_mask = jnp.zeros((B, S), jnp.bool_).at[:, -16:].set(True)  # True == pad

    model = CopyBartDecoderPallas(params, PAD_ID, EOS_ID, NH,
                                  is_copy=True, coverage=False)

    hidden_state, copy_attn = model.forward(decoder_input, encoder_output,
                                            encoder_mask)
    copy_probs = model.get_copy_score(hidden_state, encoder_output, encoder_mask)

    jax.block_until_ready((hidden_state, copy_attn, copy_probs))
    assert hidden_state.shape == (B, T, H)
    assert copy_attn.shape == (B, NH, T, S)
    assert copy_probs.shape == (B, T, S)
    print("KERNEL_OK")
</pallas_src>

<mosaic_0001>
module attributes {stable_mosaic.version = 11 : i64} {
  func.func @_ln_linear_kernel(%arg0: i32, %arg1: memref<256x256xf32, #tpu.memory_space<vmem>>, %arg2: memref<1x256xf32, #tpu.memory_space<vmem>>, %arg3: memref<1x256xf32, #tpu.memory_space<vmem>>, %arg4: memref<256x768xbf16, #tpu.memory_space<vmem>>, %arg5: memref<1x768xf32, #tpu.memory_space<vmem>>, %arg6: memref<256x256xbf16, #tpu.memory_space<vmem>>, %arg7: memref<256x768xbf16, #tpu.memory_space<vmem>>) attributes {dimension_semantics = [#tpu.dimension_semantics<parallel>], iteration_bounds = array<i64: 1>, scalar_prefetch = 0 : i64, scratch_operands = 0 : i64, tpu.core_type = #tpu.core_type<tc>, window_params = [{transform_indices = @transform_0, window_bounds = array<i64: 256, 256>}, {pipeline_mode = #tpu.pipeline_mode<synchronous>, transform_indices = @transform_1, window_bounds = array<i64: 1, 256>}, {pipeline_mode = #tpu.pipeline_mode<synchronous>, transform_indices = @transform_2, window_bounds = array<i64: 1, 256>}, {pipeline_mode = #tpu.pipeline_mode<synchronous>, transform_indices = @transform_3, window_bounds = array<i64: 256, 768>}, {pipeline_mode = #tpu.pipeline_mode<synchronous>, transform_indices = @transform_4, window_bounds = array<i64: 1, 768>}, {transform_indices = @transform_5, window_bounds = array<i64: 256, 256>}, {transform_indices = @transform_6, window_bounds = array<i64: 256, 768>}]} {
    %c0 = arith.constant 0 : index
    %c0_0 = arith.constant 0 : index
    %0 = vector.load %arg1[%c0, %c0_0] : memref<256x256xf32, #tpu.memory_space<vmem>>, vector<256x256xf32>
    %c0_1 = arith.constant 0 : index
    %c0_2 = arith.constant 0 : index
    %1 = vector.load %arg2[%c0_1, %c0_2] : memref<1x256xf32, #tpu.memory_space<vmem>>, vector<1x256xf32>
    %c0_3 = arith.constant 0 : index
    %c0_4 = arith.constant 0 : index
    %2 = vector.load %arg3[%c0_3, %c0_4] : memref<1x256xf32, #tpu.memory_space<vmem>>, vector<1x256xf32>
    %cst = arith.constant dense<0.000000e+00> : vector<256xf32>
    %3 = vector.multi_reduction <add>, %0, %cst [1] : vector<256x256xf32> to vector<256xf32>
    %4 = vector.shape_cast %3 : vector<256xf32> to vector<256x1xf32>
    %cst_5 = arith.constant 2.560000e+02 : f32
    %5 = vector.broadcast %cst_5 : f32 to vector<256x1xf32>
    %6 = arith.divf %4, %5 : vector<256x1xf32>
    %7 = vector.broadcast %6 : vector<256x1xf32> to vector<256x256xf32>
    %8 = arith.subf %0, %7 : vector<256x256xf32>
    %9 = arith.mulf %8, %8 : vector<256x256xf32>
    %cst_6 = arith.constant dense<0.000000e+00> : vector<256xf32>
    %10 = vector.multi_reduction <add>, %9, %cst_6 [1] : vector<256x256xf32> to vector<256xf32>
    %11 = vector.shape_cast %10 : vector<256xf32> to vector<256x1xf32>
    %cst_7 = arith.constant 2.560000e+02 : f32
    %12 = vector.broadcast %cst_7 : f32 to vector<256x1xf32>
    %13 = arith.divf %11, %12 : vector<256x1xf32>
    %14 = vector.broadcast %6 : vector<256x1xf32> to vector<256x256xf32>
    %15 = arith.subf %0, %14 : vector<256x256xf32>
    %cst_8 = arith.constant 9.99999974E-6 : f32
    %16 = vector.broadcast %cst_8 : f32 to vector<256x1xf32>
    %17 = arith.addf %13, %16 : vector<256x1xf32>
    %18 = math.rsqrt %17 : vector<256x1xf32>
    %19 = vector.broadcast %18 : vector<256x1xf32> to vector<256x256xf32>
    %20 = arith.mulf %15, %19 : vector<256x256xf32>
    %21 = vector.broadcast %1 : vector<1x256xf32> to vector<256x256xf32>
    %22 = arith.mulf %20, %21 : vector<256x256xf32>
    %23 = vector.broadcast %2 : vector<1x256xf32> to vector<256x256xf32>
    %24 = arith.addf %22, %23 : vector<256x256xf32>
    %25 = arith.truncf %24 : vector<256x256xf32> to vector<256x256xbf16>
    %c0_9 = arith.constant 0 : index
    %c0_10 = arith.constant 0 : index
    %26 = vector.load %arg6[%c0_9, %c0_10] : memref<256x256xbf16, #tpu.memory_space<vmem>>, vector<256x256xbf16>
    tpu.vector_store %arg6[%c0_9, %c0_10], %25 {strides = array<i32>} : memref<256x256xbf16, #tpu.memory_space<vmem>>, vector<256x256xbf16>,
    %c0_11 = arith.constant 0 : index
    %c0_12 = arith.constant 0 : index
    %27 = vector.load %arg4[%c0_11, %c0_12] : memref<256x768xbf16, #tpu.memory_space<vmem>>, vector<256x768xbf16>
    %cst_13 = arith.constant dense<0.000000e+00> : vector<256x768xf32>
    %28 = tpu.matmul %25, %27, %cst_13 {dimension_numbers = #tpu.dot_dimension_numbers<[1], [0], [0], [1], [0, 0, 1, 1], [], []>} : vector<256x256xbf16>, vector<256x768xbf16>, vector<256x768xf32> -> vector<256x768xf32>
    %c0_14 = arith.constant 0 : index
    %c0_15 = arith.constant 0 : index
    %29 = vector.load %arg5[%c0_14, %c0_15] : memref<1x768xf32, #tpu.memory_space<vmem>>, vector<1x768xf32>
    %30 = vector.broadcast %29 : vector<1x768xf32> to vector<256x768xf32>
    %31 = arith.addf %28, %30 : vector<256x768xf32>
    %32 = arith.truncf %31 : vector<256x768xf32> to vector<256x768xbf16>
    %c0_16 = arith.constant 0 : index
    %c0_17 = arith.constant 0 : index
    %33 = vector.load %arg7[%c0_16, %c0_17] : memref<256x768xbf16, #tpu.memory_space<vmem>>, vector<256x768xbf16>
    tpu.vector_store %arg7[%c0_16, %c0_17], %32 {strides = array<i32>} : memref<256x768xbf16, #tpu.memory_space<vmem>>, vector<256x768xbf16>,
    return
  }
  func.func @transform_0(%arg0: i32) -> (i32, i32) {
    %c0_i32 = arith.constant 0 : i32
    %c0_i32_0 = arith.constant 0 : i32
    return %arg0, %c0_i32 : i32, i32
  }
  func.func @transform_1(%arg0: i32) -> (i32, i32) {
    %c0_i32 = arith.constant 0 : i32
    %c0_i32_0 = arith.constant 0 : i32
    %c0_i32_1 = arith.constant 0 : i32
    return %c0_i32, %c0_i32_0 : i32, i32
  }
  func.func @transform_2(%arg0: i32) -> (i32, i32) {
    %c0_i32 = arith.constant 0 : i32
    %c0_i32_0 = arith.constant 0 : i32
    %c0_i32_1 = arith.constant 0 : i32
    return %c0_i32, %c0_i32_0 : i32, i32
  }
  func.func @transform_3(%arg0: i32) -> (i32, i32) {
    %c0_i32 = arith.constant 0 : i32
    %c0_i32_0 = arith.constant 0 : i32
    %c0_i32_1 = arith.constant 0 : i32
    return %c0_i32, %c0_i32_0 : i32, i32
  }
  func.func @transform_4(%arg0: i32) -> (i32, i32) {
    %c0_i32 = arith.constant 0 : i32
    %c0_i32_0 = arith.constant 0 : i32
    %c0_i32_1 = arith.constant 0 : i32
    return %c0_i32, %c0_i32_0 : i32, i32
  }
  func.func @transform_5(%arg0: i32) -> (i32, i32) {
    %c0_i32 = arith.constant 0 : i32
    %c0_i32_0 = arith.constant 0 : i32
    return %arg0, %c0_i32 : i32, i32
  }
  func.func @transform_6(%arg0: i32) -> (i32, i32) {
    %c0_i32 = arith.constant 0 : i32
    %c0_i32_0 = arith.constant 0 : i32
    return %arg0, %c0_i32 : i32, i32
  }
}

</mosaic_0001>

<llo_original>
// kernel: tpu_custom_call.1
$region0: #{tpu_custom_call.1}
  #allocation0 [shape = 'u32[]', space=smem, size = 0x4, offset = 0x4, fixed_abs, tag = 'smem constant byte address 0x4 - core index']
  #allocation1 [shape = 'u32[144,128]{1,0:T(1,128)}', space=vmem, size = 0x12000, scoped, tag = 'internal scratch']
  %s0 = inlined_call_operand.hbm [shape: f32[256,256], index: 0, kind: input, shape index: {}]
  %s1 = inlined_call_operand.hbm [shape: f32[1,256], index: 1, kind: input, shape index: {}]
  %s2 = inlined_call_operand.hbm [shape: f32[1,256], index: 2, kind: input, shape index: {}]
  %s3 = inlined_call_operand.hbm [shape: bf16[256,768], index: 3, kind: input, shape index: {}]
  %s4 = inlined_call_operand.vmem [shape: f32[1,768], index: 4, kind: input, shape index: {}]
  %s5 = inlined_call_operand.hbm [shape: bf16[256,256], index: 5, kind: output, shape index: {0}]
  %s6 = inlined_call_operand.hbm [shape: bf16[256,768], index: 6, kind: output, shape index: {1}]
  %7 = xla_tuple %s5, %s6
  %s8 = sld [smem:[#allocation0]]
  $region54: #{tpu_custom_call.1} parent=0
    _
  %s10 = ssub.s32 1, %s8
  %s11 = scalar_select 0, %s10, %s8
  $region1: #{tpu_custom_call.1} parent=0
    #allocation2 [shape = 'u8[262144]{0}', space=vmem, size = 0x40000, scoped, tag = 'input window, operand 0, single buffered']
    #allocation3 [shape = 's32[1]{0}', space=sflag, size = 0x4, scoped, tag = 'scoped memory for tpu_custom_call.1']
    #allocation4 [shape = 's32[1]{0}', space=sflag, size = 0x4, scoped, tag = 'scoped memory for tpu_custom_call.1']
    #allocation5 [shape = 'u8[1024]{0}', space=vmem, size = 0x400, scoped, tag = 'input window, operand 1, single buffered']
    #allocation6 [shape = 's32[1]{0}', space=sflag, size = 0x4, scoped, tag = 'scoped memory for tpu_custom_call.1']
    #allocation7 [shape = 'u8[1024]{0}', space=vmem, size = 0x400, scoped, tag = 'input window, operand 2, single buffered']
    #allocation8 [shape = 'u8[393216]{0}', space=vmem, size = 0x60000, scoped, tag = 'input window, operand 3, single buffered']
    #allocation9 [shape = 's32[1]{0}', space=sflag, size = 0x4, scoped, tag = 'scoped memory for tpu_custom_call.1']
    #allocation10 [shape = 'u8[131072]{0}', space=vmem, size = 0x20000, scoped, tag = 'output window, operand 0, single buffered']
    #allocation11 [shape = 'u8[393216]{0}', space=vmem, size = 0x60000, scoped, tag = 'output window, operand 1, single buffered']
    #allocation12 [shape = 's32[1]{0}', space=sflag, size = 0x4, scoped, tag = 'scoped memory for tpu_custom_call.1']
    %12 = vsyncpa [#allocation3], 0
    %13 = vsyncpa [#allocation6], 0
    %14 = vsyncpa [#allocation9], 0
    %15 = vsyncpa [#allocation4], 0
    %16 = vsyncpa [#allocation12], 0
    // Predicated region
    $region2: #{tpu_custom_call.1} parent=1 // pred_check
      _
    $region3: #{tpu_custom_call.1} parent=1 // pred_check_branch
      %18 = sbr.rel (0) target = $region5
    $region4: #{tpu_custom_call.1} parent=1 // pred_region
      %s20 = ssub.s32 8192, 8192
      %21 = vsyncadd [#allocation3], %s20
      %s22 = sshll.u32 [#allocation2], 4
      %s23 = int_to_ptr.vmem [resolvable:$true] %s22
      %28 = dma.hbm_to_vmem [thread:$0]  %s0, 8192, %s23, [#allocation3], 256, 256, 16
    $region5: #{tpu_custom_call.1} parent=1 // pred_fallthru
      _
    // Predicated region
    $region6: #{tpu_custom_call.1} parent=1 // pred_check
      _
    $region7: #{tpu_custom_call.1} parent=1 // pred_check_branch
      %30 = sbr.rel (0) target = $region9
    $region8: #{tpu_custom_call.1} parent=1 // pred_region
      %s32 = ssub.s32 32, 32
      %33 = vsyncadd [#allocation6], %s32
      %s35 = sshll.u32 [#allocation5], 4
      %s36 = int_to_ptr.vmem [resolvable:$true] %s35
      %38 = dma.hbm_to_vmem [thread:$0]  %s1, 32, %s36, [#allocation6]
    $region9: #{tpu_custom_call.1} parent=1 // pred_fallthru
      _
    // Predicated region
    $region10: #{tpu_custom_call.1} parent=1 // pred_check
      _
    $region11: #{tpu_custom_call.1} parent=1 // pred_check_branch
      %40 = sbr.rel (0) target = $region13
    $region12: #{tpu_custom_call.1} parent=1 // pred_region
      %s42 = ssub.s32 32, 32
      %43 = vsyncadd [#allocation6], %s42
      %s45 = sshll.u32 [#allocation7], 4
      %s46 = int_to_ptr.vmem [resolvable:$true] %s45
      %48 = dma.hbm_to_vmem [thread:$0]  %s2, 32, %s46, [#allocation6]
    $region13: #{tpu_custom_call.1} parent=1 // pred_fallthru
      _
    // Predicated region
    $region14: #{tpu_custom_call.1} parent=1 // pred_check
      _
    $region15: #{tpu_custom_call.1} parent=1 // pred_check_branch
      %50 = sbr.rel (0) target = $region17
    $region16: #{tpu_custom_call.1} parent=1 // pred_region
      %s52 = ssub.s32 12288, 12288
      %53 = vsyncadd [#allocation9], %s52
      %s54 = sshll.u32 [#allocation8], 4
      %s55 = int_to_ptr.vmem [resolvable:$true] %s54
      %60 = dma.hbm_to_vmem [thread:$0]  %s3, 12288, %s55, [#allocation9], 384, 384, 24
    $region17: #{tpu_custom_call.1} parent=1 // pred_fallthru
      _
    // Predicated region
    $region18: #{tpu_custom_call.1} parent=1 // pred_check
      _
    $region19: #{tpu_custom_call.1} parent=1 // pred_check_branch
      %62 = sbr.rel (0) target = $region21
    $region20: #{tpu_custom_call.1} parent=1 // pred_region
      _
    $region21: #{tpu_custom_call.1} parent=1 // pred_fallthru
      _
    // Predicated region
    $region22: #{tpu_custom_call.1} parent=1 // pred_check
      _
    $region23: #{tpu_custom_call.1} parent=1 // pred_check_branch
      %64 = sbr.rel (0) target = $region25
    $region24: #{tpu_custom_call.1} parent=1 // pred_region
      %65 = dma.done [#allocation3], 8192
    $region25: #{tpu_custom_call.1} parent=1 // pred_fallthru
      _
    // Predicated region
    $region26: #{tpu_custom_call.1} parent=1 // pred_check
      _
    $region27: #{tpu_custom_call.1} parent=1 // pred_check_branch
      %67 = sbr.rel (0) target = $region29
    $region28: #{tpu_custom_call.1} parent=1 // pred_region
      %68 = dma.done [#allocation6], 32
    $region29: #{tpu_custom_call.1} parent=1 // pred_fallthru
      _
    // Predicated region
    $region30: #{tpu_custom_call.1} parent=1 // pred_check
      _
    $region31: #{tpu_custom_call.1} parent=1 // pred_check_branch
      %70 = sbr.rel (0) target = $region33
    $region32: #{tpu_custom_call.1} parent=1 // pred_region
      %71 = dma.done [#allocation6], 32
    $region33: #{tpu_custom_call.1} parent=1 // pred_fallthru
      _
    // Predicated region
    $region34: #{tpu_custom_call.1} parent=1 // pred_check
      _
    $region35: #{tpu_custom_call.1} parent=1 // pred_check_branch
      %73 = sbr.rel (0) target = $region37
    $region36: #{tpu_custom_call.1} parent=1 // pred_region
      %74 = dma.done [#allocation9], 12288
    $region37: #{tpu_custom_call.1} parent=1 // pred_fallthru
      _
    %v75 = vld [vmem:[#allocation2] sm:$0xff]
    %v76 = vld [vmem:[#allocation2 + $0x8] sm:$0xff]
    %v77 = vld [vmem:[#allocation2 + $0x10] sm:$0xff]
    %v78 = vld [vmem:[#allocation2 + $0x18] sm:$0xff]
    %v79 = vld [vmem:[#allocation2 + $0x20] sm:$0xff]
    %v80 = vld [vmem:[#allocation2 + $0x28] sm:$0xff]
    %v81 = vld [vmem:[#allocation2 + $0x30] sm:$0xff]
    %v82 = vld [vmem:[#allocation2 + $0x38] sm:$0xff]
    %v83 = vld [vmem:[#allocation2 + $0x40] sm:$0xff]
    %v84 = vld [vmem:[#allocation2 + $0x48] sm:$0xff]
    %v85 = vld [vmem:[#allocation2 + $0x50] sm:$0xff]
    %v86 = vld [vmem:[#allocation2 + $0x58] sm:$0xff]
    %v87 = vld [vmem:[#allocation2 + $0x60] sm:$0xff]
    %v88 = vld [vmem:[#allocation2 + $0x68] sm:$0xff]
    %v89 = vld [vmem:[#allocation2 + $0x70] sm:$0xff]
    %v90 = vld [vmem:[#allocation2 + $0x78] sm:$0xff]
    %v91 = vld [vmem:[#allocation2 + $0x80] sm:$0xff]
    %v92 = vld [vmem:[#allocation2 + $0x88] sm:$0xff]
    %v93 = vld [vmem:[#allocation2 + $0x90] sm:$0xff]
    %v94 = vld [vmem:[#allocation2 + $0x98] sm:$0xff]
    %v95 = vld [vmem:[#allocation2 + $0xa0] sm:$0xff]
    %v96 = vld [vmem:[#allocation2 + $0xa8] sm:$0xff]
    %v97 = vld [vmem:[#allocation2 + $0xb0] sm:$0xff]
    %v98 = vld [vmem:[#allocation2 + $0xb8] sm:$0xff]
    %v99 = vld [vmem:[#allocation2 + $0xc0] sm:$0xff]
    %v100 = vld [vmem:[#allocation2 + $0xc8] sm:$0xff]
    %v101 = vld [vmem:[#allocation2 + $0xd0] sm:$0xff]
    %v102 = vld [vmem:[#allocation2 + $0xd8] sm:$0xff]
    %v103 = vld [vmem:[#allocation2 + $0xe0] sm:$0xff]
    %v104 = vld [vmem:[#allocation2 + $0xe8] sm:$0xff]
    %v105 = vld [vmem:[#allocation2 + $0xf0] sm:$0xff]
    %v106 = vld [vmem:[#allocation2 + $0xf8] sm:$0xff]
    %v107 = vld [vmem:[#allocation2 + $0x100] sm:$0xff]
    %v108 = vld [vmem:[#allocation2 + $0x108] sm:$0xff]
    %v109 = vld [vmem:[#allocation2 + $0x110] sm:$0xff]
    %v110 = vld [vmem:[#allocation2 + $0x118] sm:$0xff]
    %v111 = vld [vmem:[#allocation2 + $0x120] sm:$0xff]
    %v112 = vld [vmem:[#allocation2 + $0x128] sm:$0xff]
    %v113 = vld [vmem:[#allocation2 + $0x130] sm:$0xff]
    %v114 = vld [vmem:[#allocation2 + $0x138] sm:$0xff]
    %v115 = vld [vmem:[#allocation2 + $0x140] sm:$0xff]
    %v116 = vld [vmem:[#allocation2 + $0x148] sm:$0xff]
    %v117 = vld [vmem:[#allocation2 + $0x150] sm:$0xff]
    %v118 = vld [vmem:[#allocation2 + $0x158] sm:$0xff]
    %v119 = vld [vmem:[#allocation2 + $0x160] sm:$0xff]
    %v120 = vld [vmem:[#allocation2 + $0x168] sm:$0xff]
    %v121 = vld [vmem:[#allocation2 + $0x170] sm:$0xff]
    %v122 = vld [vmem:[#allocation2 + $0x178] sm:$0xff]
    %v123 = vld [vmem:[#allocation2 + $0x180] sm:$0xff]
    %v124 = vld [vmem:[#allocation2 + $0x188] sm:$0xff]
    %v125 = vld [vmem:[#allocation2 + $0x190] sm:$0xff]
    %v126 = vld [vmem:[#allocation2 + $0x198] sm:$0xff]
    %v127 = vld [vmem:[#allocation2 + $0x1a0] sm:$0xff]
    %v128 = vld [vmem:[#allocation2 + $0x1a8] sm:$0xff]
    %v129 = vld [vmem:[#allocation2 + $0x1b0] sm:$0xff]
    %v130 = vld [vmem:[#allocation2 + $0x1b8] sm:$0xff]
    %v131 = vld [vmem:[#allocation2 + $0x1c0] sm:$0xff]
    %v132 = vld [vmem:[#allocation2 + $0x1c8] sm:$0xff]
    %v133 = vld [vmem:[#allocation2 + $0x1d0] sm:$0xff]
    %v134 = vld [vmem:[#allocation2 + $0x1d8] sm:$0xff]
    %v135 = vld [vmem:[#allocation2 + $0x1e0] sm:$0xff]
    %v136 = vld [vmem:[#allocation2 + $0x1e8] sm:$0xff]
    %v137 = vld [vmem:[#allocation2 + $0x1f0] sm:$0xff]
    %v138 = vld [vmem:[#allocation2 + $0x1f8] sm:$0xff]
    %v139 = vld [vmem:[#allocation5] sm:$0x3]
    %v140 = vld [vmem:[#allocation7] sm:$0x3]
    %v141 = vadd.f32 %v75, %v76
    %142 = vadd.xlane.f32.xlu0 %v141
    %v143 = vpop.xlane.xlu0 %142
    %v144 = vadd.f32 %v77, %v78
    %145 = vadd.xlane.f32.xlu0 %v144
    %v146 = vpop.xlane.xlu0 %145
    %v147 = vadd.f32 %v79, %v80
    %148 = vadd.xlane.f32.xlu0 %v147
    %v149 = vpop.xlane.xlu0 %148
    %v150 = vadd.f32 %v81, %v82
    %151 = vadd.xlane.f32.xlu0 %v150
    %v152 = vpop.xlane.xlu0 %151
    %v153 = vadd.f32 %v83, %v84
    %154 = vadd.xlane.f32.xlu0 %v153
    %v155 = vpop.xlane.xlu0 %154
    %v156 = vadd.f32 %v85, %v86
    %157 = vadd.xlane.f32.xlu0 %v156
    %v158 = vpop.xlane.xlu0 %157
    %v159 = vadd.f32 %v87, %v88
    %160 = vadd.xlane.f32.xlu0 %v159
    %v161 = vpop.xlane.xlu0 %160
    %v162 = vadd.f32 %v89, %v90
    %163 = vadd.xlane.f32.xlu0 %v162
    %v164 = vpop.xlane.xlu0 %163
    %v165 = vadd.f32 %v91, %v92
    %166 = vadd.xlane.f32.xlu0 %v165
    %v167 = vpop.xlane.xlu0 %166
    %v168 = vadd.f32 %v93, %v94
    %169 = vadd.xlane.f32.xlu0 %v168
    %v170 = vpop.xlane.xlu0 %169
    %v171 = vadd.f32 %v95, %v96
    %172 = vadd.xlane.f32.xlu0 %v171
    %v173 = vpop.xlane.xlu0 %172
    %v174 = vadd.f32 %v97, %v98
    %175 = vadd.xlane.f32.xlu0 %v174
    %v176 = vpop.xlane.xlu0 %175
    %v177 = vadd.f32 %v99, %v100
    %178 = vadd.xlane.f32.xlu0 %v177
    %v179 = vpop.xlane.xlu0 %178
    %v180 = vadd.f32 %v101, %v102
    %181 = vadd.xlane.f32.xlu0 %v180
    %v182 = vpop.xlane.xlu0 %181
    %v183 = vadd.f32 %v103, %v104
    %184 = vadd.xlane.f32.xlu0 %v183
    %v185 = vpop.xlane.xlu0 %184
    %v186 = vadd.f32 %v105, %v106
    %187 = vadd.xlane.f32.xlu0 %v186
    %v188 = vpop.xlane.xlu0 %187
    %v189 = vadd.f32 %v107, %v108
    %190 = vadd.xlane.f32.xlu0 %v189
    %v191 = vpop.xlane.xlu0 %190
    %v192 = vadd.f32 %v109, %v110
    %193 = vadd.xlane.f32.xlu0 %v192
    %v194 = vpop.xlane.xlu0 %193
    %v195 = vadd.f32 %v111, %v112
    %196 = vadd.xlane.f32.xlu0 %v195
    %v197 = vpop.xlane.xlu0 %196
    %v198 = vadd.f32 %v113, %v114
    %199 = vadd.xlane.f32.xlu0 %v198
    %v200 = vpop.xlane.xlu0 %199
    %v201 = vadd.f32 %v115, %v116
    %202 = vadd.xlane.f32.xlu0 %v201
    %v203 = vpop.xlane.xlu0 %202
    %v204 = vadd.f32 %v117, %v118
    %205 = vadd.xlane.f32.xlu0 %v204
    %v206 = vpop.xlane.xlu0 %205
    %v207 = vadd.f32 %v119, %v120
    %208 = vadd.xlane.f32.xlu0 %v207
    %v209 = vpop.xlane.xlu0 %208
    %v210 = vadd.f32 %v121, %v122
    %211 = vadd.xlane.f32.xlu0 %v210
    %v212 = vpop.xlane.xlu0 %211
    %v213 = vadd.f32 %v123, %v124
    %214 = vadd.xlane.f32.xlu0 %v213
    %v215 = vpop.xlane.xlu0 %214
    %v216 = vadd.f32 %v125, %v126
    %217 = vadd.xlane.f32.xlu0 %v216
    %v218 = vpop.xlane.xlu0 %217
    %v219 = vadd.f32 %v127, %v128
    %220 = vadd.xlane.f32.xlu0 %v219
    %v221 = vpop.xlane.xlu0 %220
    %v222 = vadd.f32 %v129, %v130
    %223 = vadd.xlane.f32.xlu0 %v222
    %v224 = vpop.xlane.xlu0 %223
    %v225 = vadd.f32 %v131, %v132
    %226 = vadd.xlane.f32.xlu0 %v225
    %v227 = vpop.xlane.xlu0 %226
    %v228 = vadd.f32 %v133, %v134
    %229 = vadd.xlane.f32.xlu0 %v228
    %v230 = vpop.xlane.xlu0 %229
    %v231 = vadd.f32 %v135, %v136
    %232 = vadd.xlane.f32.xlu0 %v231
    %v233 = vpop.xlane.xlu0 %232
    %v234 = vadd.f32 %v137, %v138
    %235 = vadd.xlane.f32.xlu0 %v234
    %v236 = vpop.xlane.xlu0 %235
    %v237 = vrcp.pop 256.0
    %v238 = vmul.f32 %v143, %v237
    %v239 = vmul.f32 %v146, %v237
    %v240 = vmul.f32 %v149, %v237
    %v241 = vmul.f32 %v152, %v237
    %v242 = vmul.f32 %v155, %v237
    %v243 = vmul.f32 %v158, %v237
    %v244 = vmul.f32 %v161, %v237
    %v245 = vmul.f32 %v164, %v237
    %v246 = vmul.f32 %v167, %v237
    %v247 = vmul.f32 %v170, %v237
    %v248 = vmul.f32 %v173, %v237
    %v249 = vmul.f32 %v176, %v237
    %v250 = vmul.f32 %v179, %v237
    %v251 = vmul.f32 %v182, %v237
    %v252 = vmul.f32 %v185, %v237
    %v253 = vmul.f32 %v188, %v237
    %v254 = vmul.f32 %v191, %v237
    %v255 = vmul.f32 %v194, %v237
    %v256 = vmul.f32 %v197, %v237
    %v257 = vmul.f32 %v200, %v237
    %v258 = vmul.f32 %v203, %v237
    %v259 = vmul.f32 %v206, %v237
    %v260 = vmul.f32 %v209, %v237
    %v261 = vmul.f32 %v212, %v237
    %v262 = vmul.f32 %v215, %v237
    %v263 = vmul.f32 %v218, %v237
    %v264 = vmul.f32 %v221, %v237
    %v265 = vmul.f32 %v224, %v237
    %v266 = vmul.f32 %v227, %v237
    %v267 = vmul.f32 %v230, %v237
    %v268 = vmul.f32 %v233, %v237
    %v269 = vmul.f32 %v236, %v237
    %v270 = vsub.f32 %v75, %v238
    %v271 = vsub.f32 %v76, %v238
    %v272 = vsub.f32 %v77, %v239
    %v273 = vsub.f32 %v78, %v239
    %v274 = vsub.f32 %v79, %v240
    %v275 = vsub.f32 %v80, %v240
    %v276 = vsub.f32 %v81, %v241
    %v277 = vsub.f32 %v82, %v241
    %v278 = vsub.f32 %v83, %v242
    %v279 = vsub.f32 %v84, %v242
    %v280 = vsub.f32 %v85, %v243
    %v281 = vsub.f32 %v86, %v243
    %v282 = vsub.f32 %v87, %v244
    %v283 = vsub.f32 %v88, %v244
    %v284 = vsub.f32 %v89, %v245
    %v285 = vsub.f32 %v90, %v245
    %v286 = vsub.f32 %v91, %v246
    %v287 = vsub.f32 %v92, %v246
    %v288 = vsub.f32 %v93, %v247
    %v289 = vsub.f32 %v94, %v247
    %v290 = vsub.f32 %v95, %v248
    %v291 = vsub.f32 %v96, %v248
    %v292 = vsub.f32 %v97, %v249
    %v293 = vsub.f32 %v98, %v249
    %v294 = vsub.f32 %v99, %v250
    %v295 = vsub.f32 %v100, %v250
    %v296 = vsub.f32 %v101, %v251
    %v297 = vsub.f32 %v102, %v251
    %v298 = vsub.f32 %v103, %v252
    %v299 = vsub.f32 %v104, %v252
    %v300 = vsub.f32 %v105, %v253
    %v301 = vsub.f32 %v106, %v253
    %v302 = vsub.f32 %v107, %v254
    %v303 = vsub.f32 %v108, %v254
    %v304 = vsub.f32 %v109, %v255
    %v305 = vsub.f32 %v110, %v255
    %v306 = vsub.f32 %v111, %v256
    %v307 = vsub.f32 %v112, %v256
    %v308 = vsub.f32 %v113, %v257
    %v309 = vsub.f32 %v114, %v257
    %v310 = vsub.f32 %v115, %v258
    %v311 = vsub.f32 %v116, %v258
    %v312 = vsub.f32 %v117, %v259
    %v313 = vsub.f32 %v118, %v259
    %v314 = vsub.f32 %v119, %v260
    %v315 = vsub.f32 %v120, %v260
    %v316 = vsub.f32 %v121, %v261
    %v317 = vsub.f32 %v122, %v261
    %v318 = vsub.f32 %v123, %v262
    %v319 = vsub.f32 %v124, %v262
    %v320 = vsub.f32 %v125, %v263
    %v321 = vsub.f32 %v126, %v263
    %v322 = vsub.f32 %v127, %v264
    %v323 = vsub.f32 %v128, %v264
    %v324 = vsub.f32 %v129, %v265
    %v325 = vsub.f32 %v130, %v265
    %v326 = vsub.f32 %v131, %v266
    %v327 = vsub.f32 %v132, %v266
    %v328 = vsub.f32 %v133, %v267
    %v329 = vsub.f32 %v134, %v267
    %v330 = vsub.f32 %v135, %v268
    %v331 = vsub.f32 %v136, %v268
    %v332 = vsub.f32 %v137, %v269
    %v333 = vsub.f32 %v138, %v269
    %v334 = vmul.f32 %v270, %v270
    %v335 = vmul.f32 %v271, %v271
    %v336 = vmul.f32 %v272, %v272
    %v337 = vmul.f32 %v273, %v273
    %v338 = vmul.f32 %v274, %v274
    %v339 = vmul.f32 %v275, %v275
    %v340 = vmul.f32 %v276, %v276
    %v341 = vmul.f32 %v277, %v277
    %v342 = vmul.f32 %v278, %v278
    %v343 = vmul.f32 %v279, %v279
    %v344 = vmul.f32 %v280, %v280
    %v345 = vmul.f32 %v281, %v281
    %v346 = vmul.f32 %v282, %v282
    %v347 = vmul.f32 %v283, %v283
    %v348 = vmul.f32 %v284, %v284
    %v349 = vmul.f32 %v285, %v285
    %v350 = vmul.f32 %v286, %v286
    %v351 = vmul.f32 %v287, %v287
    %v352 = vmul.f32 %v288, %v288
    %v353 = vmul.f32 %v289, %v289
    %v354 = vmul.f32 %v290, %v290
    %v355 = vmul.f32 %v291, %v291
    %v356 = vmul.f32 %v292, %v292
    %v357 = vmul.f32 %v293, %v293
    %v358 = vmul.f32 %v294, %v294
    %v359 = vmul.f32 %v295, %v295
    %v360 = vmul.f32 %v296, %v296
    %v361 = vmul.f32 %v297, %v297
    %v362 = vmul.f32 %v298, %v298
    %v363 = vmul.f32 %v299, %v299
    %v364 = vmul.f32 %v300, %v300
    %v365 = vmul.f32 %v301, %v301
    %v366 = vmul.f32 %v302, %v302
    %v367 = vmul.f32 %v303, %v303
    %v368 = vmul.f32 %v304, %v304
    %v369 = vmul.f32 %v305, %v305
    %v370 = vmul.f32 %v306, %v306
    %v371 = vmul.f32 %v307, %v307
    %v372 = vmul.f32 %v308, %v308
    %v373 = vmul.f32 %v309, %v309
    %v374 = vmul.f32 %v310, %v310
    %v375 = vmul.f32 %v311, %v311
    %v376 = vmul.f32 %v312, %v312
    %v377 = vmul.f32 %v313, %v313
    %v378 = vmul.f32 %v314, %v314
    %v379 = vmul.f32 %v315, %v315
    %v380 = vmul.f32 %v316, %v316
    %v381 = vmul.f32 %v317, %v317
    %v382 = vmul.f32 %v318, %v318
    %v383 = vmul.f32 %v319, %v319
    %v384 = vmul.f32 %v320, %v320
    %v385 = vmul.f32 %v321, %v321
    %v386 = vmul.f32 %v322, %v322
    %v387 = vmul.f32 %v323, %v323
    %v388 = vmul.f32 %v324, %v324
    %v389 = vmul.f32 %v325, %v325
    %v390 = vmul.f32 %v326, %v326
    %v391 = vmul.f32 %v327, %v327
    %v392 = vmul.f32 %v328, %v328
    %v393 = vmul.f32 %v329, %v329
    %v394 = vmul.f32 %v330, %v330
    %v395 = vmul.f32 %v331, %v331
    %v396 = vmul.f32 %v332, %v332
    %v397 = vmul.f32 %v333, %v333
    %v398 = vadd.f32 %v334, %v335
    %399 = vadd.xlane.f32.xlu0 %v398
    %v400 = vpop.xlane.xlu0 %399
    %v401 = vadd.f32 %v336, %v337
    %402 = vadd.xlane.f32.xlu0 %v401
    %v403 = vpop.xlane.xlu0 %402
    %v404 = vadd.f32 %v338, %v339
    %405 = vadd.xlane.f32.xlu0 %v404
    %v406 = vpop.xlane.xlu0 %405
    %v407 = vadd.f32 %v340, %v341
    %408 = vadd.xlane.f32.xlu0 %v407
    %v409 = vpop.xlane.xlu0 %408
    %v410 = vadd.f32 %v342, %v343
    %411 = vadd.xlane.f32.xlu0 %v410
    %v412 = vpop.xlane.xlu0 %411
    %v413 = vadd.f32 %v344, %v345
    %414 = vadd.xlane.f32.xlu0 %v413
    %v415 = vpop.xlane.xlu0 %414
    %v416 = vadd.f32 %v346, %v347
    %417 = vadd.xlane.f32.xlu0 %v416
    %v418 = vpop.xlane.xlu0 %417
    %v419 = vadd.f32 %v348, %v349
    %420 = vadd.xlane.f32.xlu0 %v419
    %v421 = vpop.xlane.xlu0 %420
    %v422 = vadd.f32 %v350, %v351
    %423 = vadd.xlane.f32.xlu0 %v422
    %v424 = vpop.xlane.xlu0 %423
    %v425 = vadd.f32 %v352, %v353
    %426 = vadd.xlane.f32.xlu0 %v425
    %v427 = vpop.xlane.xlu0 %426
    %v428 = vadd.f32 %v354, %v355
    %429 = vadd.xlane.f32.xlu0 %v428
    %v430 = vpop.xlane.xlu0 %429
    %v431 = vadd.f32 %v356, %v357
    %432 = vadd.xlane.f32.xlu0 %v431
    %v433 = vpop.xlane.xlu0 %432
    %v434 = vadd.f32 %v358, %v359
    %435 = vadd.xlane.f32.xlu0 %v434
    %v436 = vpop.xlane.xlu0 %435
    %v437 = vadd.f32 %v360, %v361
    %438 = vadd.xlane.f32.xlu0 %v437
    %v439 = vpop.xlane.xlu0 %438
    %v440 = vadd.f32 %v362, %v363
    %441 = vadd.xlane.f32.xlu0 %v440
    %v442 = vpop.xlane.xlu0 %441
    %v443 = vadd.f32 %v364, %v365
    %444 = vadd.xlane.f32.xlu0 %v443
    %v445 = vpop.xlane.xlu0 %444
    %v446 = vadd.f32 %v366, %v367
    %447 = vadd.xlane.f32.xlu0 %v446
    %v448 = vpop.xlane.xlu0 %447
    %v449 = vadd.f32 %v368, %v369
    %450 = vadd.xlane.f32.xlu0 %v449
    %v451 = vpop.xlane.xlu0 %450
    %v452 = vadd.f32 %v370, %v371
    %453 = vadd.xlane.f32.xlu0 %v452
    %v454 = vpop.xlane.xlu0 %453
    %v455 = vadd.f32 %v372, %v373
    %456 = vadd.xlane.f32.xlu0 %v455
    %v457 = vpop.xlane.xlu0 %456
    %v458 = vadd.f32 %v374, %v375
    %459 = vadd.xlane.f32.xlu0 %v458
    %v460 = vpop.xlane.xlu0 %459
    %v461 = vadd.f32 %v376, %v377
    %462 = vadd.xlane.f32.xlu0 %v461
    %v463 = vpop.xlane.xlu0 %462
    %v464 = vadd.f32 %v378, %v379
    %465 = vadd.xlane.f32.xlu0 %v464
    %v466 = vpop.xlane.xlu0 %465
    %v467 = vadd.f32 %v380, %v381
    %468 = vadd.xlane.f32.xlu0 %v467
    %v469 = vpop.xlane.xlu0 %468
    %v470 = vadd.f32 %v382, %v383
    %471 = vadd.xlane.f32.xlu0 %v470
    %v472 = vpop.xlane.xlu0 %471
    %v473 = vadd.f32 %v384, %v385
    %474 = vadd.xlane.f32.xlu0 %v473
    %v475 = vpop.xlane.xlu0 %474
    %v476 = vadd.f32 %v386, %v387
    %477 = vadd.xlane.f32.xlu0 %v476
    %v478 = vpop.xlane.xlu0 %477
    %v479 = vadd.f32 %v388, %v389
    %480 = vadd.xlane.f32.xlu0 %v479
    %v481 = vpop.xlane.xlu0 %480
    %v482 = vadd.f32 %v390, %v391
    %483 = vadd.xlane.f32.xlu0 %v482
    %v484 = vpop.xlane.xlu0 %483
    %v485 = vadd.f32 %v392, %v393
    %486 = vadd.xlane.f32.xlu0 %v485
    %v487 = vpop.xlane.xlu0 %486
    %v488 = vadd.f32 %v394, %v395
    %489 = vadd.xlane.f32.xlu0 %v488
    %v490 = vpop.xlane.xlu0 %489
    %v491 = vadd.f32 %v396, %v397
    %492 = vadd.xlane.f32.xlu0 %v491
    %v493 = vpop.xlane.xlu0 %492
    %v494 = vmul.f32 %v400, %v237
    %v495 = vmul.f32 %v403, %v237
    %v496 = vmul.f32 %v406, %v237
    %v497 = vmul.f32 %v409, %v237
    %v498 = vmul.f32 %v412, %v237
    %v499 = vmul.f32 %v415, %v237
    %v500 = vmul.f32 %v418, %v237
    %v501 = vmul.f32 %v421, %v237
    %v502 = vmul.f32 %v424, %v237
    %v503 = vmul.f32 %v427, %v237
    %v504 = vmul.f32 %v430, %v237
    %v505 = vmul.f32 %v433, %v237
    %v506 = vmul.f32 %v436, %v237
    %v507 = vmul.f32 %v439, %v237
    %v508 = vmul.f32 %v442, %v237
    %v509 = vmul.f32 %v445, %v237
    %v510 = vmul.f32 %v448, %v237
    %v511 = vmul.f32 %v451, %v237
    %v512 = vmul.f32 %v454, %v237
    %v513 = vmul.f32 %v457, %v237
    %v514 = vmul.f32 %v460, %v237
    %v515 = vmul.f32 %v463, %v237
    %v516 = vmul.f32 %v466, %v237
    %v517 = vmul.f32 %v469, %v237
    %v518 = vmul.f32 %v472, %v237
    %v519 = vmul.f32 %v475, %v237
    %v520 = vmul.f32 %v478, %v237
    %v521 = vmul.f32 %v481, %v237
    %v522 = vmul.f32 %v484, %v237
    %v523 = vmul.f32 %v487, %v237
    %v524 = vmul.f32 %v490, %v237
    %v525 = vmul.f32 %v493, %v237
    %v526 = vadd.f32 %v494, 1e-05
    %v527 = vadd.f32 %v495, 1e-05
    %v528 = vadd.f32 %v496, 1e-05
    %v529 = vadd.f32 %v497, 1e-05
    %v530 = vadd.f32 %v498, 1e-05
    %v531 = vadd.f32 %v499, 1e-05
    %v532 = vadd.f32 %v500, 1e-05
    %v533 = vadd.f32 %v501, 1e-05
    %v534 = vadd.f32 %v502, 1e-05
    %v535 = vadd.f32 %v503, 1e-05
    %v536 = vadd.f32 %v504, 1e-05
    %v537 = vadd.f32 %v505, 1e-05
    %v538 = vadd.f32 %v506, 1e-05
    %v539 = vadd.f32 %v507, 1e-05
    %v540 = vadd.f32 %v508, 1e-05
    %v541 = vadd.f32 %v509, 1e-05
    %v542 = vadd.f32 %v510, 1e-05
    %v543 = vadd.f32 %v511, 1e-05
    %v544 = vadd.f32 %v512, 1e-05
    %v545 = vadd.f32 %v513, 1e-05
    %v546 = vadd.f32 %v514, 1e-05
    %v547 = vadd.f32 %v515, 1e-05
    %v548 = vadd.f32 %v516, 1e-05
    %v549 = vadd.f32 %v517, 1e-05
    %v550 = vadd.f32 %v518, 1e-05
    %v551 = vadd.f32 %v519, 1e-05
    %v552 = vadd.f32 %v520, 1e-05
    %v553 = vadd.f32 %v521, 1e-05
    %v554 = vadd.f32 %v522, 1e-05
    %v555 = vadd.f32 %v523, 1e-05
    %v556 = vadd.f32 %v524, 1e-05
    %v557 = vadd.f32 %v525, 1e-05
    %v558 = vrsqrt.pop %v526
    %v559 = vrsqrt.pop %v527
    %v560 = vrsqrt.pop %v528
    %v561 = vrsqrt.pop %v529
    %v562 = vrsqrt.pop %v530
    %v563 = vrsqrt.pop %v531
    %v564 = vrsqrt.pop %v532
    %v565 = vrsqrt.pop %v533
    %v566 = vrsqrt.pop %v534
    %v567 = vrsqrt.pop %v535
    %v568 = vrsqrt.pop %v536
    %v569 = vrsqrt.pop %v537
    %v570 = vrsqrt.pop %v538
    %v571 = vrsqrt.pop %v539
    %v572 = vrsqrt.pop %v540
    %v573 = vrsqrt.pop %v541
    %v574 = vrsqrt.pop %v542
    %v575 = vrsqrt.pop %v543
    %v576 = vrsqrt.pop %v544
    %v577 = vrsqrt.pop %v545
    %v578 = vrsqrt.pop %v546
    %v579 = vrsqrt.pop %v547
    %v580 = vrsqrt.pop %v548
    %v581 = vrsqrt.pop %v549
    %v582 = vrsqrt.pop %v550
    %v583 = vrsqrt.pop %v551
    %v584 = vrsqrt.pop %v552
    %v585 = vrsqrt.pop %v553
    %v586 = vrsqrt.pop %v554
    %v587 = vrsqrt.pop %v555
    %v588 = vrsqrt.pop %v556
    %v589 = vrsqrt.pop %v557
    %v590 = vmul.f32 %v270, %v558
    %v591 = vmul.f32 %v271, %v558
    %v592 = vmul.f32 %v272, %v559
    %v593 = vmul.f32 %v273, %v559
    %v594 = vmul.f32 %v274, %v560
    %v595 = vmul.f32 %v275, %v560
    %v596 = vmul.f32 %v276, %v561
    %v597 = vmul.f32 %v277, %v561
    %v598 = vmul.f32 %v278, %v562
    %v599 = vmul.f32 %v279, %v562
    %v600 = vmul.f32 %v280, %v563
    %v601 = vmul.f32 %v281, %v563
    %v602 = vmul.f32 %v282, %v564
    %v603 = vmul.f32 %v283, %v564
    %v604 = vmul.f32 %v284, %v565
    %v605 = vmul.f32 %v285, %v565
    %v606 = vmul.f32 %v286, %v566
    %v607 = vmul.f32 %v287, %v566
    %v608 = vmul.f32 %v288, %v567
    %v609 = vmul.f32 %v289, %v567
    %v610 = vmul.f32 %v290, %v568
    %v611 = vmul.f32 %v291, %v568
    %v612 = vmul.f32 %v292, %v569
    %v613 = vmul.f32 %v293, %v569
    %v614 = vmul.f32 %v294, %v570
    %v615 = vmul.f32 %v295, %v570
    %v616 = vmul.f32 %v296, %v571
    %v617 = vmul.f32 %v297, %v571
    %v618 = vmul.f32 %v298, %v572
    %v619 = vmul.f32 %v299, %v572
    %v620 = vmul.f32 %v300, %v573
    %v621 = vmul.f32 %v301, %v573
    %v622 = vmul.f32 %v302, %v574
    %v623 = vmul.f32 %v303, %v574
    %v624 = vmul.f32 %v304, %v575
    %v625 = vmul.f32 %v305, %v575
    %v626 = vmul.f32 %v306, %v576
    %v627 = vmul.f32 %v307, %v576
    %v628 = vmul.f32 %v308, %v577
    %v629 = vmul.f32 %v309, %v577
    %v630 = vmul.f32 %v310, %v578
    %v631 = vmul.f32 %v311, %v578
    %v632 = vmul.f32 %v312, %v579
    %v633 = vmul.f32 %v313, %v579
    %v634 = vmul.f32 %v314, %v580
    %v635 = vmul.f32 %v315, %v580
    %v636 = vmul.f32 %v316, %v581
    %v637 = vmul.f32 %v317, %v581
    %v638 = vmul.f32 %v318, %v582
    %v639 = vmul.f32 %v319, %v582
    %v640 = vmul.f32 %v320, %v583
    %v641 = vmul.f32 %v321, %v583
    %v642 = vmul.f32 %v322, %v584
    %v643 = vmul.f32 %v323, %v584
    %v644 = vmul.f32 %v324, %v585
    %v645 = vmul.f32 %v325, %v585
    %v646 = vmul.f32 %v326, %v586
    %v647 = vmul.f32 %v327, %v586
    %v648 = vmul.f32 %v328, %v587
    %v649 = vmul.f32 %v329, %v587
    %v650 = vmul.f32 %v330, %v588
    %v651 = vmul.f32 %v331, %v588
    %v652 = vmul.f32 %v332, %v589
    %v653 = vmul.f32 %v333, %v589
    %v655 = vlaneseq
    %v656 = vshrl.u32 %v655, 7
    %v657 = vsub.s32 0, %v656
    %v658 = vrot.slane %v139, %v657
    %v659 = vlaneseq
    %v660 = vshrl.u32 %v659, 7
    %v661 = vsub.s32 1, %v660
    %v662 = vrot.slane %v139, %v661
    %v665 = vmul.f32 %v590, %v658
    %v666 = vmul.f32 %v591, %v662
    %v667 = vmul.f32 %v592, %v658
    %v668 = vmul.f32 %v593, %v662
    %v669 = vmul.f32 %v594, %v658
    %v670 = vmul.f32 %v595, %v662
    %v671 = vmul.f32 %v596, %v658
    %v672 = vmul.f32 %v597, %v662
    %v673 = vmul.f32 %v598, %v658
    %v674 = vmul.f32 %v599, %v662
    %v675 = vmul.f32 %v600, %v658
    %v676 = vmul.f32 %v601, %v662
    %v677 = vmul.f32 %v602, %v658
    %v678 = vmul.f32 %v603, %v662
    %v679 = vmul.f32 %v604, %v658
    %v680 = vmul.f32 %v605, %v662
    %v681 = vmul.f32 %v606, %v658
    %v682 = vmul.f32 %v607, %v662
    %v683 = vmul.f32 %v608, %v658
    %v684 = vmul.f32 %v609, %v662
    %v685 = vmul.f32 %v610, %v658
    %v686 = vmul.f32 %v611, %v662
    %v687 = vmul.f32 %v612, %v658
    %v688 = vmul.f32 %v613, %v662
    %v689 = vmul.f32 %v614, %v658
    %v690 = vmul.f32 %v615, %v662
    %v691 = vmul.f32 %v616, %v658
    %v692 = vmul.f32 %v617, %v662
    %v693 = vmul.f32 %v618, %v658
    %v694 = vmul.f32 %v619, %v662
    %v695 = vmul.f32 %v620, %v658
    %v696 = vmul.f32 %v621, %v662
    %v697 = vmul.f32 %v622, %v658
    %v698 = vmul.f32 %v623, %v662
    %v699 = vmul.f32 %v624, %v658
    %v700 = vmul.f32 %v625, %v662
    %v701 = vmul.f32 %v626, %v658
    %v702 = vmul.f32 %v627, %v662
    %v703 = vmul.f32 %v628, %v658
    %v704 = vmul.f32 %v629, %v662
    %v705 = vmul.f32 %v630, %v658
    %v706 = vmul.f32 %v631, %v662
    %v707 = vmul.f32 %v632, %v658
    %v708 = vmul.f32 %v633, %v662
    %v709 = vmul.f32 %v634, %v658
    %v710 = vmul.f32 %v635, %v662
    %v711 = vmul.f32 %v636, %v658
    %v712 = vmul.f32 %v637, %v662
    %v713 = vmul.f32 %v638, %v658
    %v714 = vmul.f32 %v639, %v662
    %v715 = vmul.f32 %v640, %v658
    %v716 = vmul.f32 %v641, %v662
    %v717 = vmul.f32 %v642, %v658
    %v718 = vmul.f32 %v643, %v662
    %v719 = vmul.f32 %v644, %v658
    %v720 = vmul.f32 %v645, %v662
    %v721 = vmul.f32 %v646, %v658
    %v722 = vmul.f32 %v647, %v662
    %v723 = vmul.f32 %v648, %v658
    %v724 = vmul.f32 %v649, %v662
    %v725 = vmul.f32 %v650, %v658
    %v726 = vmul.f32 %v651, %v662
    %v727 = vmul.f32 %v652, %v658
    %v728 = vmul.f32 %v653, %v662
    %v730 = vlaneseq
    %v731 = vshrl.u32 %v730, 7
    %v732 = vsub.s32 0, %v731
    %v733 = vrot.slane %v140, %v732
    %v734 = vlaneseq
    %v735 = vshrl.u32 %v734, 7
    %v736 = vsub.s32 1, %v735
    %v737 = vrot.slane %v140, %v736
    %v740 = vadd.f32 %v665, %v733
    %v741 = vadd.f32 %v666, %v737
    %v742 = vadd.f32 %v667, %v733
    %v743 = vadd.f32 %v668, %v737
    %v744 = vadd.f32 %v669, %v733
    %v745 = vadd.f32 %v670, %v737
    %v746 = vadd.f32 %v671, %v733
    %v747 = vadd.f32 %v672, %v737
    %v748 = vadd.f32 %v673, %v733
    %v749 = vadd.f32 %v674, %v737
    %v750 = vadd.f32 %v675, %v733
    %v751 = vadd.f32 %v676, %v737
    %v752 = vadd.f32 %v677, %v733
    %v753 = vadd.f32 %v678, %v737
    %v754 = vadd.f32 %v679, %v733
    %v755 = vadd.f32 %v680, %v737
    %v756 = vadd.f32 %v681, %v733
    %v757 = vadd.f32 %v682, %v737
    %v758 = vadd.f32 %v683, %v733
    %v759 = vadd.f32 %v684, %v737
    %v760 = vadd.f32 %v685, %v733
    %v761 = vadd.f32 %v686, %v737
    %v762 = vadd.f32 %v687, %v733
    %v763 = vadd.f32 %v688, %v737
    %v764 = vadd.f32 %v689, %v733
    %v765 = vadd.f32 %v690, %v737
    %v766 = vadd.f32 %v691, %v733
    %v767 = vadd.f32 %v692, %v737
    %v768 = vadd.f32 %v693, %v733
    %v769 = vadd.f32 %v694, %v737
    %v770 = vadd.f32 %v695, %v733
    %v771 = vadd.f32 %v696, %v737
    %v772 = vadd.f32 %v697, %v733
    %v773 = vadd.f32 %v698, %v737
    %v774 = vadd.f32 %v699, %v733
    %v775 = vadd.f32 %v700, %v737
    %v776 = vadd.f32 %v701, %v733
    %v777 = vadd.f32 %v702, %v737
    %v778 = vadd.f32 %v703, %v733
    %v779 = vadd.f32 %v704, %v737
    %v780 = vadd.f32 %v705, %v733
    %v781 = vadd.f32 %v706, %v737
    %v782 = vadd.f32 %v707, %v733
    %v783 = vadd.f32 %v708, %v737
    %v784 = vadd.f32 %v709, %v733
    %v785 = vadd.f32 %v710, %v737
    %v786 = vadd.f32 %v711, %v733
    %v787 = vadd.f32 %v712, %v737
    %v788 = vadd.f32 %v713, %v733
    %v789 = vadd.f32 %v714, %v737
    %v790 = vadd.f32 %v715, %v733
    %v791 = vadd.f32 %v716, %v737
    %v792 = vadd.f32 %v717, %v733
    %v793 = vadd.f32 %v718, %v737
    %v794 = vadd.f32 %v719, %v733
    %v795 = vadd.f32 %v720, %v737
    %v796 = vadd.f32 %v721, %v733
    %v797 = vadd.f32 %v722, %v737
    %v798 = vadd.f32 %v723, %v733
    %v799 = vadd.f32 %v724, %v737
    %v800 = vadd.f32 %v725, %v733
    %v801 = vadd.f32 %v726, %v737
    %v802 = vadd.f32 %v727, %v733
    %v803 = vadd.f32 %v728, %v737
    %v804 = vpack.c.bf16 %v742, %v740
    %v805 = vpack.c.bf16 %v743, %v741
    %v806 = vpack.c.bf16 %v746, %v744
    %v807 = vpack.c.bf16 %v747, %v745
    %v808 = vpack.c.bf16 %v750, %v748
    %v809 = vpack.c.bf16 %v751, %v749
    %v810 = vpack.c.bf16 %v754, %v752
    %v811 = vpack.c.bf16 %v755, %v753
    %v812 = vpack.c.bf16 %v758, %v756
    %v813 = vpack.c.bf16 %v759, %v757
    %v814 = vpack.c.bf16 %v762, %v760
    %v815 = vpack.c.bf16 %v763, %v761
    %v816 = vpack.c.bf16 %v766, %v764
    %v817 = vpack.c.bf16 %v767, %v765
    %v818 = vpack.c.bf16 %v770, %v768
    %v819 = vpack.c.bf16 %v771, %v769
    %v820 = vpack.c.bf16 %v774, %v772
    %v821 = vpack.c.bf16 %v775, %v773
    %v822 = vpack.c.bf16 %v778, %v776
    %v823 = vpack.c.bf16 %v779, %v777
    %v824 = vpack.c.bf16 %v782, %v780
    %v825 = vpack.c.bf16 %v783, %v781
    %v826 = vpack.c.bf16 %v786, %v784
    %v827 = vpack.c.bf16 %v787, %v785
    %v828 = vpack.c.bf16 %v790, %v788
    %v829 = vpack.c.bf16 %v791, %v789
    %v830 = vpack.c.bf16 %v794, %v792
    %v831 = vpack.c.bf16 %v795, %v793
    %v832 = vpack.c.bf16 %v798, %v796
    %v833 = vpack.c.bf16 %v799, %v797
    %v834 = vpack.c.bf16 %v802, %v800
    %v835 = vpack.c.bf16 %v803, %v801
    %v868 = vunpack.c.l.b16 %v804
    %v869 = vunpack.c.l.b16 %v805
    %v870 = vunpack.c.h.b16 %v804
    %v871 = vunpack.c.h.b16 %v805
    %v872 = vunpack.c.l.b16 %v806
    %v873 = vunpack.c.l.b16 %v807
    %v874 = vunpack.c.h.b16 %v806
    %v875 = vunpack.c.h.b16 %v807
    %v876 = vunpack.c.l.b16 %v808
    %v877 = vunpack.c.l.b16 %v809
    %v878 = vunpack.c.h.b16 %v808
    %v879 = vunpack.c.h.b16 %v809
    %v880 = vunpack.c.l.b16 %v810
    %v881 = vunpack.c.l.b16 %v811
    %v882 = vunpack.c.h.b16 %v810
    %v883 = vunpack.c.h.b16 %v811
    %v884 = vunpack.c.l.b16 %v812
    %v885 = vunpack.c.l.b16 %v813
    %v886 = vunpack.c.h.b16 %v812
    %v887 = vunpack.c.h.b16 %v813
    %v888 = vunpack.c.l.b16 %v814
    %v889 = vunpack.c.l.b16 %v815
    %v890 = vunpack.c.h.b16 %v814
    %v891 = vunpack.c.h.b16 %v815
    %v892 = vunpack.c.l.b16 %v816
    %v893 = vunpack.c.l.b16 %v817
    %v894 = vunpack.c.h.b16 %v816
    %v895 = vunpack.c.h.b16 %v817
    %v896 = vunpack.c.l.b16 %v818
    %v897 = vunpack.c.l.b16 %v819
    %v898 = vunpack.c.h.b16 %v818
    %v899 = vunpack.c.h.b16 %v819
    %v900 = vunpack.c.l.b16 %v820
    %v901 = vunpack.c.l.b16 %v821
    %v902 = vunpack.c.h.b16 %v820
    %v903 = vunpack.c.h.b16 %v821
    %v904 = vunpack.c.l.b16 %v822
    %v905 = vunpack.c.l.b16 %v823
    %v906 = vunpack.c.h.b16 %v822
    %v907 = vunpack.c.h.b16 %v823
    %v908 = vunpack.c.l.b16 %v824
    %v909 = vunpack.c.l.b16 %v825
    %v910 = vunpack.c.h.b16 %v824
    %v911 = vunpack.c.h.b16 %v825
    %v912 = vunpack.c.l.b16 %v826
    %v913 = vunpack.c.l.b16 %v827
    %v914 = vunpack.c.h.b16 %v826
    %v915 = vunpack.c.h.b16 %v827
    %v916 = vunpack.c.l.b16 %v828
    %v917 = vunpack.c.l.b16 %v829
    %v918 = vunpack.c.h.b16 %v828
    %v919 = vunpack.c.h.b16 %v829
    %v920 = vunpack.c.l.b16 %v830
    %v921 = vunpack.c.l.b16 %v831
    %v922 = vunpack.c.h.b16 %v830
    %v923 = vunpack.c.h.b16 %v831
    %v924 = vunpack.c.l.b16 %v832
    %v925 = vunpack.c.l.b16 %v833
    %v926 = vunpack.c.h.b16 %v832
    %v927 = vunpack.c.h.b16 %v833
    %v928 = vunpack.c.l.b16 %v834
    %v929 = vunpack.c.l.b16 %v835
    %v930 = vunpack.c.h.b16 %v834
    %v931 = vunpack.c.h.b16 %v835
    %v932 = vpack.c.b16 %v869, %v868
    %v933 = vpack.c.b16 %v871, %v870
    %v934 = vpack.c.b16 %v873, %v872
    %v935 = vpack.c.b16 %v875, %v874
    %v936 = vpack.c.b16 %v877, %v876
    %v937 = vpack.c.b16 %v879, %v878
    %v938 = vpack.c.b16 %v881, %v880
    %v939 = vpack.c.b16 %v883, %v882
    %v940 = vpack.c.b16 %v885, %v884
    %v941 = vpack.c.b16 %v887, %v886
    %v942 = vpack.c.b16 %v889, %v888
    %v943 = vpack.c.b16 %v891, %v890
    %v944 = vpack.c.b16 %v893, %v892
    %v945 = vpack.c.b16 %v895, %v894
    %v946 = vpack.c.b16 %v897, %v896
    %v947 = vpack.c.b16 %v899, %v898
    %v948 = vpack.c.b16 %v901, %v900
    %v949 = vpack.c.b16 %v903, %v902
    %v950 = vpack.c.b16 %v905, %v904
    %v951 = vpack.c.b16 %v907, %v906
    %v952 = vpack.c.b16 %v909, %v908
    %v953 = vpack.c.b16 %v911, %v910
    %v954 = vpack.c.b16 %v913, %v912
    %v955 = vpack.c.b16 %v915, %v914
    %v956 = vpack.c.b16 %v917, %v916
    %v957 = vpack.c.b16 %v919, %v918
    %v958 = vpack.c.b16 %v921, %v920
    %v959 = vpack.c.b16 %v923, %v922
    %v960 = vpack.c.b16 %v925, %v924
    %v961 = vpack.c.b16 %v927, %v926
    %v962 = vpack.c.b16 %v929, %v928
    %v963 = vpack.c.b16 %v931, %v930
    %996 = vst [vmem:[#allocation10] sm:$0xff] %v932
    %997 = vst [vmem:[#allocation10 + $0x8] sm:$0xff] %v933
    %998 = vst [vmem:[#allocation10 + $0x10] sm:$0xff] %v934
    %999 = vst [vmem:[#allocation10 + $0x18] sm:$0xff] %v935
    %1000 = vst [vmem:[#allocation10 + $0x20] sm:$0xff] %v936
    %1001 = vst [vmem:[#allocation10 + $0x28] sm:$0xff] %v937
    %1002 = vst [vmem:[#allocation10 + $0x30] sm:$0xff] %v938
    %1003 = vst [vmem:[#allocation10 + $0x38] sm:$0xff] %v939
    %1004 = vst [vmem:[#allocation10 + $0x40] sm:$0xff] %v940
    %1005 = vst [vmem:[#allocation10 + $0x48] sm:$0xff] %v941
    %1006 = vst [vmem:[#allocation10 + $0x50] sm:$0xff] %v942
    %1007 = vst [vmem:[#allocation10 + $0x58] sm:$0xff] %v943
    %1008 = vst [vmem:[#allocation10 + $0x60] sm:$0xff] %v944
    %1009 = vst [vmem:[#allocation10 + $0x68] sm:$0xff] %v945
    %1010 = vst [vmem:[#allocation10 + $0x70] sm:$0xff] %v946
    %1011 = vst [vmem:[#allocation10 + $0x78] sm:$0xff] %v947
    %1012 = vst [vmem:[#allocation10 + $0x80] sm:$0xff] %v948
    %1013 = vst [vmem:[#allocation10 + $0x88] sm:$0xff] %v949
    %1014 = vst [vmem:[#allocation10 + $0x90] sm:$0xff] %v950
    %1015 = vst [vmem:[#allocation10 + $0x98] sm:$0xff] %v951
    %1016 = vst [vmem:[#allocation10 + $0xa0] sm:$0xff] %v952
    %1017 = vst [vmem:[#allocation10 + $0xa8] sm:$0xff] %v953
    %1018 = vst [vmem:[#allocation10 + $0xb0] sm:$0xff] %v954
    %1019 = vst [vmem:[#allocation10 + $0xb8] sm:$0xff] %v955
    %1020 = vst [vmem:[#allocation10 + $0xc0] sm:$0xff] %v956
    %1021 = vst [vmem:[#allocation10 + $0xc8] sm:$0xff] %v957
    %1022 = vst [vmem:[#allocation10 + $0xd0] sm:$0xff] %v958
    %1023 = vst [vmem:[#allocation10 + $0xd8] sm:$0xff] %v959
    %1024 = vst [vmem:[#allocation10 + $0xe0] sm:$0xff] %v960
    %1025 = vst [vmem:[#allocation10 + $0xe8] sm:$0xff] %v961
    %1026 = vst [vmem:[#allocation10 + $0xf0] sm:$0xff] %v962
    %1027 = vst [vmem:[#allocation10 + $0xf8] sm:$0xff] %v963
    %v1028 = vld [vmem:[#allocation8] sm:$0xff]
    %v1029 = vld [vmem:[#allocation8 + $0x8] sm:$0xff]
    %v1030 = vld [vmem:[#allocation8 + $0x10] sm:$0xff]
    %v1031 = vld [vmem:[#allocation8 + $0x18] sm:$0xff]
    %v1032 = vld [vmem:[#allocation8 + $0x20] sm:$0xff]
    %v1033 = vld [vmem:[#allocation8 + $0x28] sm:$0xff]
    %v1034 = vld [vmem:[#allocation8 + $0x30] sm:$0xff]
    %v1035 = vld [vmem:[#allocation8 + $0x38] sm:$0xff]
    %v1036 = vld [vmem:[#allocation8 + $0x40] sm:$0xff]
    %v1037 = vld [vmem:[#allocation8 + $0x48] sm:$0xff]
    %v1038 = vld [vmem:[#allocation8 + $0x50] sm:$0xff]
    %v1039 = vld [vmem:[#allocation8 + $0x58] sm:$0xff]
    %v1040 = vld [vmem:[#allocation8 + $0x60] sm:$0xff]
    %v1041 = vld [vmem:[#allocation8 + $0x68] sm:$0xff]
    %v1042 = vld [vmem:[#allocation8 + $0x70] sm:$0xff]
    %v1043 = vld [vmem:[#allocation8 + $0x78] sm:$0xff]
    %v1044 = vld [vmem:[#allocation8 + $0x80] sm:$0xff]
    %v1045 = vld [vmem:[#allocation8 + $0x88] sm:$0xff]
    %v1046 = vld [vmem:[#allocation8 + $0x90] sm:$0xff]
    %v1047 = vld [vmem:[#allocation8 + $0x98] sm:$0xff]
    %v1048 = vld [vmem:[#allocation8 + $0xa0] sm:$0xff]
    %v1049 = vld [vmem:[#allocation8 + $0xa8] sm:$0xff]
    %v1050 = vld [vmem:[#allocation8 + $0xb0] sm:$0xff]
    %v1051 = vld [vmem:[#allocation8 + $0xb8] sm:$0xff]
    %v1052 = vld [vmem:[#allocation8 + $0xc0] sm:$0xff]
    %v1053 = vld [vmem:[#allocation8 + $0xc8] sm:$0xff]
    %v1054 = vld [vmem:[#allocation8 + $0xd0] sm:$0xff]
    %v1055 = vld [vmem:[#allocation8 + $0xd8] sm:$0xff]
    %v1056 = vld [vmem:[#allocation8 + $0xe0] sm:$0xff]
    %v1057 = vld [vmem:[#allocation8 + $0xe8] sm:$0xff]
    %v1058 = vld [vmem:[#allocation8 + $0xf0] sm:$0xff]
    %v1059 = vld [vmem:[#allocation8 + $0xf8] sm:$0xff]
    %v1060 = vld [vmem:[#allocation8 + $0x100] sm:$0xff]
    %v1061 = vld [vmem:[#allocation8 + $0x108] sm:$0xff]
    %v1062 = vld [vmem:[#allocation8 + $0x110] sm:$0xff]
    %v1063 = vld [vmem:[#allocation8 + $0x118] sm:$0xff]
    %v1064 = vld [vmem:[#allocation8 + $0x120] sm:$0xff]
    %v1065 = vld [vmem:[#allocation8 + $0x128] sm:$0xff]
    %v1066 = vld [vmem:[#allocation8 + $0x130] sm:$0xff]
    %v1067 = vld [vmem:[#allocation8 + $0x138] sm:$0xff]
    %v1068 = vld [vmem:[#allocation8 + $0x140] sm:$0xff]
    %v1069 = vld [vmem:[#allocation8 + $0x148] sm:$0xff]
    %v1070 = vld [vmem:[#allocation8 + $0x150] sm:$0xff]
    %v1071 = vld [vmem:[#allocation8 + $0x158] sm:$0xff]
    %v1072 = vld [vmem:[#allocation8 + $0x160] sm:$0xff]
    %v1073 = vld [vmem:[#allocation8 + $0x168] sm:$0xff]
    %v1074 = vld [vmem:[#allocation8 + $0x170] sm:$0xff]
    %v1075 = vld [vmem:[#allocation8 + $0x178] sm:$0xff]
    %v1076 = vld [vmem:[#allocation8 + $0x180] sm:$0xff]
    %v1077 = vld [vmem:[#allocation8 + $0x188] sm:$0xff]
    %v1078 = vld [vmem:[#allocation8 + $0x190] sm:$0xff]
    %v1079 = vld [vmem:[#allocation8 + $0x198] sm:$0xff]
    %v1080 = vld [vmem:[#allocation8 + $0x1a0] sm:$0xff]
    %v1081 = vld [vmem:[#allocation8 + $0x1a8] sm:$0xff]
    %v1082 = vld [vmem:[#allocation8 + $0x1b0] sm:$0xff]
    %v1083 = vld [vmem:[#allocation8 + $0x1b8] sm:$0xff]
    %v1084 = vld [vmem:[#allocation8 + $0x1c0] sm:$0xff]
    %v1085 = vld [vmem:[#allocation8 + $0x1c8] sm:$0xff]
    %v1086 = vld [vmem:[#allocation8 + $0x1d0] sm:$0xff]
    %v1087 = vld [vmem:[#allocation8 + $0x1d8] sm:$0xff]
    %v1088 = vld [vmem:[#allocation8 + $0x1e0] sm:$0xff]
    %v1089 = vld [vmem:[#allocation8 + $0x1e8] sm:$0xff]
    %v1090 = vld [vmem:[#allocation8 + $0x1f0] sm:$0xff]
    %v1091 = vld [vmem:[#allocation8 + $0x1f8] sm:$0xff]
    %v1092 = vld [vmem:[#allocation8 + $0x200] sm:$0xff]
    %v1093 = vld [vmem:[#allocation8 + $0x208] sm:$0xff]
    %v1094 = vld [vmem:[#allocation8 + $0x210] sm:$0xff]
    %v1095 = vld [vmem:[#allocation8 + $0x218] sm:$0xff]
    %v1096 = vld [vmem:[#allocation8 + $0x220] sm:$0xff]
    %v1097 = vld [vmem:[#allocation8 + $0x228] sm:$0xff]
    %v1098 = vld [vmem:[#allocation8 + $0x230] sm:$0xff]
    %v1099 = vld [vmem:[#allocation8 + $0x238] sm:$0xff]
    %v1100 = vld [vmem:[#allocation8 + $0x240] sm:$0xff]
    %v1101 = vld [vmem:[#allocation8 + $0x248] sm:$0xff]
    %v1102 = vld [vmem:[#allocation8 + $0x250] sm:$0xff]
    %v1103 = vld [vmem:[#allocation8 + $0x258] sm:$0xff]
    %v1104 = vld [vmem:[#allocation8 + $0x260] sm:$0xff]
    %v1105 = vld [vmem:[#allocation8 + $0x268] sm:$0xff]
    %v1106 = vld [vmem:[#allocation8 + $0x270] sm:$0xff]
    %v1107 = vld [vmem:[#allocation8 + $0x278] sm:$0xff]
    %v1108 = vld [vmem:[#allocation8 + $0x280] sm:$0xff]
    %v1109 = vld [vmem:[#allocation8 + $0x288] sm:$0xff]
    %v1110 = vld [vmem:[#allocation8 + $0x290] sm:$0xff]
    %v1111 = vld [vmem:[#allocation8 + $0x298] sm:$0xff]
    %v1112 = vld [vmem:[#allocation8 + $0x2a0] sm:$0xff]
    %v1113 = vld [vmem:[#allocation8 + $0x2a8] sm:$0xff]
    %v1114 = vld [vmem:[#allocation8 + $0x2b0] sm:$0xff]
    %v1115 = vld [vmem:[#allocation8 + $0x2b8] sm:$0xff]
    %v1116 = vld [vmem:[#allocation8 + $0x2c0] sm:$0xff]
    %v1117 = vld [vmem:[#allocation8 + $0x2c8] sm:$0xff]
    %v1118 = vld [vmem:[#allocation8 + $0x2d0] sm:$0xff]
    %v1119 = vld [vmem:[#allocation8 + $0x2d8] sm:$0xff]
    %v1120 = vld [vmem:[#allocation8 + $0x2e0] sm:$0xff]
    %v1121 = vld [vmem:[#allocation8 + $0x2e8] sm:$0xff]
    %v1122 = vld [vmem:[#allocation8 + $0x2f0] sm:$0xff]
    %v1123 = vld [vmem:[#allocation8 + $0x2f8] sm:$0xff]
    %v1124 = vld [vmem:[%s4] sm:$0x3f]
    %v1126 = vlaneseq
    %v1127 = vshrl.u32 %v1126, 7
    %v1128 = vsub.s32 0, %v1127
    %v1129 = vrot.slane %v1124, %v1128
    %v1130 = vlaneseq
    %v1131 = vshrl.u32 %v1130, 7
    %v1132 = vsub.s32 1, %v1131
    %v1133 = vrot.slane %v1124, %v1132
    %v1134 = vlaneseq
    %v1135 = vshrl.u32 %v1134, 7
    %v1136 = vsub.s32 2, %v1135
    %v1137 = vrot.slane %v1124, %v1136
    %v1138 = vlaneseq
    %v1139 = vshrl.u32 %v1138, 7
    %v1140 = vsub.s32 3, %v1139
    %v1141 = vrot.slane %v1124, %v1140
    %v1142 = vlaneseq
    %v1143 = vshrl.u32 %v1142, 7
    %v1144 = vsub.s32 4, %v1143
    %v1145 = vrot.slane %v1124, %v1144
    %v1146 = vlaneseq
    %v1147 = vshrl.u32 %v1146, 7
    %v1148 = vsub.s32 5, %v1147
    %v1149 = vrot.slane %v1124, %v1148
    %v1252 = vunpack.c.l.b16 %v1028
    %v1253 = vunpack.c.h.b16 %v1028
    %v1254 = vunpack.c.l.b16 %v1029
    %v1255 = vunpack.c.h.b16 %v1029
    %v1256 = vunpack.c.l.b16 %v1030
    %v1257 = vunpack.c.h.b16 %v1030
    %v1258 = vunpack.c.l.b16 %v1031
    %v1259 = vunpack.c.h.b16 %v1031
    %v1260 = vunpack.c.l.b16 %v1032
    %v1261 = vunpack.c.h.b16 %v1032
    %v1262 = vunpack.c.l.b16 %v1033
    %v1263 = vunpack.c.h.b16 %v1033
    %v1264 = vunpack.c.l.b16 %v1034
    %v1265 = vunpack.c.h.b16 %v1034
    %v1266 = vunpack.c.l.b16 %v1035
    %v1267 = vunpack.c.h.b16 %v1035
    %v1268 = vunpack.c.l.b16 %v1036
    %v1269 = vunpack.c.h.b16 %v1036
    %v1270 = vunpack.c.l.b16 %v1037
    %v1271 = vunpack.c.h.b16 %v1037
    %v1272 = vunpack.c.l.b16 %v1038
    %v1273 = vunpack.c.h.b16 %v1038
    %v1274 = vunpack.c.l.b16 %v1039
    %v1275 = vunpack.c.h.b16 %v1039
    %v1276 = vunpack.c.l.b16 %v1040
    %v1277 = vunpack.c.h.b16 %v1040
    %v1278 = vunpack.c.l.b16 %v1041
    %v1279 = vunpack.c.h.b16 %v1041
    %v1280 = vunpack.c.l.b16 %v1042
    %v1281 = vunpack.c.h.b16 %v1042
    %v1282 = vunpack.c.l.b16 %v1043
    %v1283 = vunpack.c.h.b16 %v1043
    %v1284 = vunpack.c.l.b16 %v1044
    %v1285 = vunpack.c.h.b16 %v1044
    %v1286 = vunpack.c.l.b16 %v1045
    %v1287 = vunpack.c.h.b16 %v1045
    %v1288 = vunpack.c.l.b16 %v1046
    %v1289 = vunpack.c.h.b16 %v1046
    %v1290 = vunpack.c.l.b16 %v1047
    %v1291 = vunpack.c.h.b16 %v1047
    %v1292 = vunpack.c.l.b16 %v1048
    %v1293 = vunpack.c.h.b16 %v1048
    %v1294 = vunpack.c.l.b16 %v1049
    %v1295 = vunpack.c.h.b16 %v1049
    %v1296 = vunpack.c.l.b16 %v1050
    %v1297 = vunpack.c.h.b16 %v1050
    %v1298 = vunpack.c.l.b16 %v1051
    %v1299 = vunpack.c.h.b16 %v1051
    %v1300 = vunpack.c.l.b16 %v1052
    %v1301 = vunpack.c.h.b16 %v1052
    %v1302 = vunpack.c.l.b16 %v1053
    %v1303 = vunpack.c.h.b16 %v1053
    %v1304 = vunpack.c.l.b16 %v1054
    %v1305 = vunpack.c.h.b16 %v1054
    %v1306 = vunpack.c.l.b16 %v1055
    %v1307 = vunpack.c.h.b16 %v1055
    %v1308 = vunpack.c.l.b16 %v1056
    %v1309 = vunpack.c.h.b16 %v1056
    %v1310 = vunpack.c.l.b16 %v1057
    %v1311 = vunpack.c.h.b16 %v1057
    %v1312 = vunpack.c.l.b16 %v1058
    %v1313 = vunpack.c.h.b16 %v1058
    %v1314 = vunpack.c.l.b16 %v1059
    %v1315 = vunpack.c.h.b16 %v1059
    %v1316 = vunpack.c.l.b16 %v1060
    %v1317 = vunpack.c.h.b16 %v1060
    %v1318 = vunpack.c.l.b16 %v1061
    %v1319 = vunpack.c.h.b16 %v1061
    %v1320 = vunpack.c.l.b16 %v1062
    %v1321 = vunpack.c.h.b16 %v1062
    %v1322 = vunpack.c.l.b16 %v1063
    %v1323 = vunpack.c.h.b16 %v1063
    %v1324 = vunpack.c.l.b16 %v1064
    %v1325 = vunpack.c.h.b16 %v1064
    %v1326 = vunpack.c.l.b16 %v1065
    %v1327 = vunpack.c.h.b16 %v1065
    %v1328 = vunpack.c.l.b16 %v1066
    %v1329 = vunpack.c.h.b16 %v1066
    %v1330 = vunpack.c.l.b16 %v1067
    %v1331 = vunpack.c.h.b16 %v1067
    %v1332 = vunpack.c.l.b16 %v1068
    %v1333 = vunpack.c.h.b16 %v1068
    %v1334 = vunpack.c.l.b16 %v1069
    %v1335 = vunpack.c.h.b16 %v1069
    %v1336 = vunpack.c.l.b16 %v1070
    %v1337 = vunpack.c.h.b16 %v1070
    %v1338 = vunpack.c.l.b16 %v1071
    %v1339 = vunpack.c.h.b16 %v1071
    %v1340 = vunpack.c.l.b16 %v1072
    %v1341 = vunpack.c.h.b16 %v1072
    %v1342 = vunpack.c.l.b16 %v1073
    %v1343 = vunpack.c.h.b16 %v1073
    %v1344 = vunpack.c.l.b16 %v1074
    %v1345 = vunpack.c.h.b16 %v1074
    %v1346 = vunpack.c.l.b16 %v1075
    %v1347 = vunpack.c.h.b16 %v1075
    %v1348 = vunpack.c.l.b16 %v1076
    %v1349 = vunpack.c.h.b16 %v1076
    %v1350 = vunpack.c.l.b16 %v1077
    %v1351 = vunpack.c.h.b16 %v1077
    %v1352 = vunpack.c.l.b16 %v1078
    %v1353 = vunpack.c.h.b16 %v1078
    %v1354 = vunpack.c.l.b16 %v1079
    %v1355 = vunpack.c.h.b16 %v1079
    %v1356 = vunpack.c.l.b16 %v1080
    %v1357 = vunpack.c.h.b16 %v1080
    %v1358 = vunpack.c.l.b16 %v1081
    %v1359 = vunpack.c.h.b16 %v1081
    %v1360 = vunpack.c.l.b16 %v1082
    %v1361 = vunpack.c.h.b16 %v1082
    %v1362 = vunpack.c.l.b16 %v1083
    %v1363 = vunpack.c.h.b16 %v1083
    %v1364 = vunpack.c.l.b16 %v1084
    %v1365 = vunpack.c.h.b16 %v1084
    %v1366 = vunpack.c.l.b16 %v1085
    %v1367 = vunpack.c.h.b16 %v1085
    %v1368 = vunpack.c.l.b16 %v1086
    %v1369 = vunpack.c.h.b16 %v1086
    %v1370 = vunpack.c.l.b16 %v1087
    %v1371 = vunpack.c.h.b16 %v1087
    %v1372 = vunpack.c.l.b16 %v1088
    %v1373 = vunpack.c.h.b16 %v1088
    %v1374 = vunpack.c.l.b16 %v1089
    %v1375 = vunpack.c.h.b16 %v1089
    %v1376 = vunpack.c.l.b16 %v1090
    %v1377 = vunpack.c.h.b16 %v1090
    %v1378 = vunpack.c.l.b16 %v1091
    %v1379 = vunpack.c.h.b16 %v1091
    %v1380 = vunpack.c.l.b16 %v1092
    %v1381 = vunpack.c.h.b16 %v1092
    %v1382 = vunpack.c.l.b16 %v1093
    %v1383 = vunpack.c.h.b16 %v1093
    %v1384 = vunpack.c.l.b16 %v1094
    %v1385 = vunpack.c.h.b16 %v1094
    %v1386 = vunpack.c.l.b16 %v1095
    %v1387 = vunpack.c.h.b16 %v1095
    %v1388 = vunpack.c.l.b16 %v1096
    %v1389 = vunpack.c.h.b16 %v1096
    %v1390 = vunpack.c.l.b16 %v1097
    %v1391 = vunpack.c.h.b16 %v1097
    %v1392 = vunpack.c.l.b16 %v1098
    %v1393 = vunpack.c.h.b16 %v1098
    %v1394 = vunpack.c.l.b16 %v1099
    %v1395 = vunpack.c.h.b16 %v1099
    %v1396 = vunpack.c.l.b16 %v1100
    %v1397 = vunpack.c.h.b16 %v1100
    %v1398 = vunpack.c.l.b16 %v1101
    %v1399 = vunpack.c.h.b16 %v1101
    %v1400 = vunpack.c.l.b16 %v1102
    %v1401 = vunpack.c.h.b16 %v1102
    %v1402 = vunpack.c.l.b16 %v1103
    %v1403 = vunpack.c.h.b16 %v1103
    %v1404 = vunpack.c.l.b16 %v1104
    %v1405 = vunpack.c.h.b16 %v1104
    %v1406 = vunpack.c.l.b16 %v1105
    %v1407 = vunpack.c.h.b16 %v1105
    %v1408 = vunpack.c.l.b16 %v1106
    %v1409 = vunpack.c.h.b16 %v1106
    %v1410 = vunpack.c.l.b16 %v1107
    %v1411 = vunpack.c.h.b16 %v1107
    %v1412 = vunpack.c.l.b16 %v1108
    %v1413 = vunpack.c.h.b16 %v1108
    %v1414 = vunpack.c.l.b16 %v1109
    %v1415 = vunpack.c.h.b16 %v1109
    %v1416 = vunpack.c.l.b16 %v1110
    %v1417 = vunpack.c.h.b16 %v1110
    %v1418 = vunpack.c.l.b16 %v1111
    %v1419 = vunpack.c.h.b16 %v1111
    %v1420 = vunpack.c.l.b16 %v1112
    %v1421 = vunpack.c.h.b16 %v1112
    %v1422 = vunpack.c.l.b16 %v1113
    %v1423 = vunpack.c.h.b16 %v1113
    %v1424 = vunpack.c.l.b16 %v1114
    %v1425 = vunpack.c.h.b16 %v1114
    %v1426 = vunpack.c.l.b16 %v1115
    %v1427 = vunpack.c.h.b16 %v1115
    %v1428 = vunpack.c.l.b16 %v1116
    %v1429 = vunpack.c.h.b16 %v1116
    %v1430 = vunpack.c.l.b16 %v1117
    %v1431 = vunpack.c.h.b16 %v1117
    %v1432 = vunpack.c.l.b16 %v1118
    %v1433 = vunpack.c.h.b16 %v1118
    %v1434 = vunpack.c.l.b16 %v1119
    %v1435 = vunpack.c.h.b16 %v1119
    %v1436 = vunpack.c.l.b16 %v1120
    %v1437 = vunpack.c.h.b16 %v1120
    %v1438 = vunpack.c.l.b16 %v1121
    %v1439 = vunpack.c.h.b16 %v1121
    %v1440 = vunpack.c.l.b16 %v1122
    %v1441 = vunpack.c.h.b16 %v1122
    %v1442 = vunpack.c.l.b16 %v1123
    %v1443 = vunpack.c.h.b16 %v1123
    %v1444 = vpack.c.b16 %v1258, %v1252
    %v1445 = vpack.c.b16 %v1259, %v1253
    %v1446 = vpack.c.b16 %v1260, %v1254
    %v1447 = vpack.c.b16 %v1261, %v1255
    %v1448 = vpack.c.b16 %v1262, %v1256
    %v1449 = vpack.c.b16 %v1263, %v1257
    %v1450 = vpack.c.b16 %v1270, %v1264
    %v1451 = vpack.c.b16 %v1271, %v1265
    %v1452 = vpack.c.b16 %v1272, %v1266
    %v1453 = vpack.c.b16 %v1273, %v1267
    %v1454 = vpack.c.b16 %v1274, %v1268
    %v1455 = vpack.c.b16 %v1275, %v1269
    %v1456 = vpack.c.b16 %v1282, %v1276
    %v1457 = vpack.c.b16 %v1283, %v1277
    %v1458 = vpack.c.b16 %v1284, %v1278
    %v1459 = vpack.c.b16 %v1285, %v1279
    %v1460 = vpack.c.b16 %v1286, %v1280
    %v1461 = vpack.c.b16 %v1287, %v1281
    %v1462 = vpack.c.b16 %v1294, %v1288
    %v1463 = vpack.c.b16 %v1295, %v1289
    %v1464 = vpack.c.b16 %v1296, %v1290
    %v1465 = vpack.c.b16 %v1297, %v1291
    %v1466 = vpack.c.b16 %v1298, %v1292
    %v1467 = vpack.c.b16 %v1299, %v1293
    %v1468 = vpack.c.b16 %v1306, %v1300
    %v1469 = vpack.c.b16 %v1307, %v1301
    %v1470 = vpack.c.b16 %v1308, %v1302
    %v1471 = vpack.c.b16 %v1309, %v1303
    %v1472 = vpack.c.b16 %v1310, %v1304
    %v1473 = vpack.c.b16 %v1311, %v1305
    %v1474 = vpack.c.b16 %v1318, %v1312
    %v1475 = vpack.c.b16 %v1319, %v1313
    %v1476 = vpack.c.b16 %v1320, %v1314
    %v1477 = vpack.c.b16 %v1321, %v1315
    %v1478 = vpack.c.b16 %v1322, %v1316
    %v1479 = vpack.c.b16 %v1323, %v1317
    %v1480 = vpack.c.b16 %v1330, %v1324
    %v1481 = vpack.c.b16 %v1331, %v1325
    %v1482 = vpack.c.b16 %v1332, %v1326
    %v1483 = vpack.c.b16 %v1333, %v1327
    %v1484 = vpack.c.b16 %v1334, %v1328
    %v1485 = vpack.c.b16 %v1335, %v1329
    %v1486 = vpack.c.b16 %v1342, %v1336
    %v1487 = vpack.c.b16 %v1343, %v1337
    %v1488 = vpack.c.b16 %v1344, %v1338
    %v1489 = vpack.c.b16 %v1345, %v1339
    %v1490 = vpack.c.b16 %v1346, %v1340
    %v1491 = vpack.c.b16 %v1347, %v1341
    %v1492 = vpack.c.b16 %v1354, %v1348
    %v1493 = vpack.c.b16 %v1355, %v1349
    %v1494 = vpack.c.b16 %v1356, %v1350
    %v1495 = vpack.c.b16 %v1357, %v1351
    %v1496 = vpack.c.b16 %v1358, %v1352
    %v1497 = vpack.c.b16 %v1359, %v1353
    %v1498 = vpack.c.b16 %v1366, %v1360
    %v1499 = vpack.c.b16 %v1367, %v1361
    %v1500 = vpack.c.b16 %v1368, %v1362
    %v1501 = vpack.c.b16 %v1369, %v1363
    %v1502 = vpack.c.b16 %v1370, %v1364
    %v1503 = vpack.c.b16 %v1371, %v1365
    %v1504 = vpack.c.b16 %v1378, %v1372
    %v1505 = vpack.c.b16 %v1379, %v1373
    %v1506 = vpack.c.b16 %v1380, %v1374
    %v1507 = vpack.c.b16 %v1381, %v1375
    %v1508 = vpack.c.b16 %v1382, %v1376
    %v1509 = vpack.c.b16 %v1383, %v1377
    %v1510 = vpack.c.b16 %v1390, %v1384
    %v1511 = vpack.c.b16 %v1391, %v1385
    %v1512 = vpack.c.b16 %v1392, %v1386
    %v1513 = vpack.c.b16 %v1393, %v1387
    %v1514 = vpack.c.b16 %v1394, %v1388
    %v1515 = vpack.c.b16 %v1395, %v1389
    %v1516 = vpack.c.b16 %v1402, %v1396
    %v1517 = vpack.c.b16 %v1403, %v1397
    %v1518 = vpack.c.b16 %v1404, %v1398
    %v1519 = vpack.c.b16 %v1405, %v1399
    %v1520 = vpack.c.b16 %v1406, %v1400
    %v1521 = vpack.c.b16 %v1407, %v1401
    %v1522 = vpack.c.b16 %v1414, %v1408
    %v1523 = vpack.c.b16 %v1415, %v1409
    %v1524 = vpack.c.b16 %v1416, %v1410
    %v1525 = vpack.c.b16 %v1417, %v1411
    %v1526 = vpack.c.b16 %v1418, %v1412
    %v1527 = vpack.c.b16 %v1419, %v1413
    %v1528 = vpack.c.b16 %v1426, %v1420
    %v1529 = vpack.c.b16 %v1427, %v1421
    %v1530 = vpack.c.b16 %v1428, %v1422
    %v1531 = vpack.c.b16 %v1429, %v1423
    %v1532 = vpack.c.b16 %v1430, %v1424
    %v1533 = vpack.c.b16 %v1431, %v1425
    %v1534 = vpack.c.b16 %v1438, %v1432
    %v1535 = vpack.c.b16 %v1439, %v1433
    %v1536 = vpack.c.b16 %v1440, %v1434
    %v1537 = vpack.c.b16 %v1441, %v1435
    %v1538 = vpack.c.b16 %v1442, %v1436
    %v1539 = vpack.c.b16 %v1443, %v1437
    %1636 = vmatprep.subr.bf16.mxu0 %v1487
    %1637 = vmatpush1.bf16.msra.mxu0 %v1486
    %1638 = vmatprep.subr.bf16.mxu0 %v1481
    %1639 = vmatpush1.bf16.msra.mxu0 %v1480
    %1640 = vmatprep.subr.bf16.mxu0 %v1475
    %1641 = vmatpush1.bf16.msra.mxu0 %v1474
    %1642 = vmatprep.subr.bf16.mxu0 %v1469
    %1643 = vmatpush1.bf16.msra.mxu0 %v1468
    %1644 = vmatprep.subr.bf16.mxu0 %v1463
    %1645 = vmatpush1.bf16.msra.mxu0 %v1462
    %1646 = vmatprep.subr.bf16.mxu0 %v1457
    %1647 = vmatpush1.bf16.msra.mxu0 %v1456
    %1648 = vmatprep.subr.bf16.mxu0 %v1451
    %1649 = vmatpush1.bf16.msra.mxu0 %v1450
    %1650 = vmatprep.subr.bf16.mxu0 %v1445
    %1651 = vmatpush1.bf16.msra.mxu0 %v1444
    %1652 = vmatprep.subr.bf16.mxu0 %v1535
    %1653 = vmatpush2.bf16.msra.mxu0 %v1534
    %1654 = vmatprep.subr.bf16.mxu0 %v1529
    %1655 = vmatpush2.bf16.msra.mxu0 %v1528
    %1656 = vmatprep.subr.bf16.mxu0 %v1523
    %1657 = vmatpush2.bf16.msra.mxu0 %v1522
    %1658 = vmatprep.subr.bf16.mxu0 %v1517
    %1659 = vmatpush2.bf16.msra.mxu0 %v1516
    %1660 = vmatprep.subr.bf16.mxu0 %v1511
    %1661 = vmatpush2.bf16.msra.mxu0 %v1510
    %1662 = vmatprep.subr.bf16.mxu0 %v1505
    %1663 = vmatpush2.bf16.msra.mxu0 %v1504
    %1664 = vmatprep.subr.bf16.mxu0 %v1499
    %1665 = vmatpush2.bf16.msra.mxu0 %v1498
    %1666 = vmatprep.subr.bf16.mxu0 %v1493
    %1667 = vmatpush2.bf16.msra.mxu0 %v1492
    %1668 = vmatprep.mubr.bf16.mxu0 %v805
    %1669 = vmatmul.mubr.bf16.gmra.mxu0 %v804
    %v1670 = vpop.f32.mrf.mxu0
    %v1671 = vadd.f32 %v1129, %v1670
    %v1672 = vpop.f32.mrf.mxu0
    %v1673 = vadd.f32 %v1133, %v1672
    %v1674 = vpop.f32.mrf.mxu0
    %v1675 = vadd.f32 %v1129, %v1674
    %v1676 = vpop.f32.mrf.mxu0
    %v1677 = vadd.f32 %v1133, %v1676
    %1678 = vmatprep.mubr.bf16.mxu0 %v807
    %1679 = vmatmul.mubr.bf16.gmra.mxu0 %v806
    %v1680 = vpop.f32.mrf.mxu0
    %v1681 = vadd.f32 %v1129, %v1680
    %v1682 = vpop.f32.mrf.mxu0
    %v1683 = vadd.f32 %v1133, %v1682
    %v1684 = vpop.f32.mrf.mxu0
    %v1685 = vadd.f32 %v1129, %v1684
    %v1686 = vpop.f32.mrf.mxu0
    %v1687 = vadd.f32 %v1133, %v1686
    %1688 = vmatprep.mubr.bf16.mxu0 %v809
    %1689 = vmatmul.mubr.bf16.gmra.mxu0 %v808
    %v1690 = vpop.f32.mrf.mxu0
    %v1691 = vadd.f32 %v1129, %v1690
    %v1692 = vpop.f32.mrf.mxu0
    %v1693 = vadd.f32 %v1133, %v1692
    %v1694 = vpop.f32.mrf.mxu0
    %v1695 = vadd.f32 %v1129, %v1694
    %v1696 = vpop.f32.mrf.mxu0
    %v1697 = vadd.f32 %v1133, %v1696
    %1698 = vmatprep.mubr.bf16.mxu0 %v811
    %1699 = vmatmul.mubr.bf16.gmra.mxu0 %v810
    %v1700 = vpop.f32.mrf.mxu0
    %v1701 = vadd.f32 %v1129, %v1700
    %v1702 = vpop.f32.mrf.mxu0
    %v1703 = vadd.f32 %v1133, %v1702
    %v1704 = vpop.f32.mrf.mxu0
    %v1705 = vadd.f32 %v1129, %v1704
    %v1706 = vpop.f32.mrf.mxu0
    %v1707 = vadd.f32 %v1133, %v1706
    %1708 = vmatprep.mubr.bf16.mxu0 %v813
    %1709 = vmatmul.mubr.bf16.gmra.mxu0 %v812
    %v1710 = vpop.f32.mrf.mxu0
    %v1711 = vadd.f32 %v1129, %v1710
    %v1712 = vpop.f32.mrf.mxu0
    %v1713 = vadd.f32 %v1133, %v1712
    %v1714 = vpop.f32.mrf.mxu0
    %v1715 = vadd.f32 %v1129, %v1714
    %v1716 = vpop.f32.mrf.mxu0
    %v1717 = vadd.f32 %v1133, %v1716
    %1718 = vmatprep.mubr.bf16.mxu0 %v815
    %1719 = vmatmul.mubr.bf16.gmra.mxu0 %v814
    %v1720 = vpop.f32.mrf.mxu0
    %v1721 = vadd.f32 %v1129, %v1720
    %v1722 = vpop.f32.mrf.mxu0
    %v1723 = vadd.f32 %v1133, %v1722
    %v1724 = vpop.f32.mrf.mxu0
    %v1725 = vadd.f32 %v1129, %v1724
    %v1726 = vpop.f32.mrf.mxu0
    %v1727 = vadd.f32 %v1133, %v1726
    %1728 = vmatprep.mubr.bf16.mxu0 %v817
    %1729 = vmatmul.mubr.bf16.gmra.mxu0 %v816
    %v1730 = vpop.f32.mrf.mxu0
    %v1731 = vadd.f32 %v1129, %v1730
    %v1732 = vpop.f32.mrf.mxu0
    %v1733 = vadd.f32 %v1133, %v1732
    %v1734 = vpop.f32.mrf.mxu0
    %v1735 = vadd.f32 %v1129, %v1734
    %v1736 = vpop.f32.mrf.mxu0
    %v1737 = vadd.f32 %v1133, %v1736
    %1738 = vmatprep.mubr.bf16.mxu0 %v819
    %1739 = vmatmul.mubr.bf16.gmra.mxu0 %v818
    %v1740 = vpop.f32.mrf.mxu0
    %v1741 = vadd.f32 %v1129, %v1740
    %v1742 = vpop.f32.mrf.mxu0
    %v1743 = vadd.f32 %v1133, %v1742
    %v1744 = vpop.f32.mrf.mxu0
    %v1745 = vadd.f32 %v1129, %v1744
    %v1746 = vpop.f32.mrf.mxu0
    %v1747 = vadd.f32 %v1133, %v1746
    %1748 = vmatprep.mubr.bf16.mxu0 %v821
    %1749 = vmatmul.mubr.bf16.gmra.mxu0 %v820
    %v1750 = vpop.f32.mrf.mxu0
    %v1751 = vadd.f32 %v1129, %v1750
    %v1752 = vpop.f32.mrf.mxu0
    %v1753 = vadd.f32 %v1133, %v1752
    %v1754 = vpop.f32.mrf.mxu0
    %v1755 = vadd.f32 %v1129, %v1754
    %v1756 = vpop.f32.mrf.mxu0
    %v1757 = vadd.f32 %v1133, %v1756
    %1758 = vmatprep.mubr.bf16.mxu0 %v823
    %1759 = vmatmul.mubr.bf16.gmra.mxu0 %v822
    %v1760 = vpop.f32.mrf.mxu0
    %v1761 = vadd.f32 %v1129, %v1760
    %v1762 = vpop.f32.mrf.mxu0
    %v1763 = vadd.f32 %v1133, %v1762
    %v1764 = vpop.f32.mrf.mxu0
    %v1765 = vadd.f32 %v1129, %v1764
    %v1766 = vpop.f32.mrf.mxu0
    %v1767 = vadd.f32 %v1133, %v1766
    %1768 = vmatprep.mubr.bf16.mxu0 %v825
    %1769 = vmatmul.mubr.bf16.gmra.mxu0 %v824
    %v1770 = vpop.f32.mrf.mxu0
    %v1771 = vadd.f32 %v1129, %v1770
    %v1772 = vpop.f32.mrf.mxu0
    %v1773 = vadd.f32 %v1133, %v1772
    %v1774 = vpop.f32.mrf.mxu0
    %v1775 = vadd.f32 %v1129, %v1774
    %v1776 = vpop.f32.mrf.mxu0
    %v1777 = vadd.f32 %v1133, %v1776
    %1778 = vmatprep.mubr.bf16.mxu0 %v827
    %1779 = vmatmul.mubr.bf16.gmra.mxu0 %v826
    %v1780 = vpop.f32.mrf.mxu0
    %v1781 = vadd.f32 %v1129, %v1780
    %v1782 = vpop.f32.mrf.mxu0
    %v1783 = vadd.f32 %v1133, %v1782
    %v1784 = vpop.f32.mrf.mxu0
    %v1785 = vadd.f32 %v1129, %v1784
    %v1786 = vpop.f32.mrf.mxu0
    %v1787 = vadd.f32 %v1133, %v1786
    %1788 = vmatprep.mubr.bf16.mxu0 %v829
    %1789 = vmatmul.mubr.bf16.gmra.mxu0 %v828
    %v1790 = vpop.f32.mrf.mxu0
    %v1791 = vadd.f32 %v1129, %v1790
    %v1792 = vpop.f32.mrf.mxu0
    %v1793 = vadd.f32 %v1133, %v1792
    %v1794 = vpop.f32.mrf.mxu0
    %v1795 = vadd.f32 %v1129, %v1794
    %v1796 = vpop.f32.mrf.mxu0
    %v1797 = vadd.f32 %v1133, %v1796
    %1798 = vmatprep.mubr.bf16.mxu0 %v831
    %1799 = vmatmul.mubr.bf16.gmra.mxu0 %v830
    %v1800 = vpop.f32.mrf.mxu0
    %v1801 = vadd.f32 %v1129, %v1800
    %v1802 = vpop.f32.mrf.mxu0
    %v1803 = vadd.f32 %v1133, %v1802
    %v1804 = vpop.f32.mrf.mxu0
    %v1805 = vadd.f32 %v1129, %v1804
    %v1806 = vpop.f32.mrf.mxu0
    %v1807 = vadd.f32 %v1133, %v1806
    %1808 = vmatprep.mubr.bf16.mxu0 %v833
    %1809 = vmatmul.mubr.bf16.gmra.mxu0 %v832
    %v1810 = vpop.f32.mrf.mxu0
    %v1811 = vadd.f32 %v1129, %v1810
    %v1812 = vpop.f32.mrf.mxu0
    %v1813 = vadd.f32 %v1133, %v1812
    %v1814 = vpop.f32.mrf.mxu0
    %v1815 = vadd.f32 %v1129, %v1814
    %v1816 = vpop.f32.mrf.mxu0
    %v1817 = vadd.f32 %v1133, %v1816
    %1818 = vmatprep.mubr.bf16.mxu0 %v835
    %1819 = vmatmul.mubr.bf16.gmra.mxu0 %v834
    %v1820 = vpop.f32.mrf.mxu0
    %v1821 = vadd.f32 %v1129, %v1820
    %v1822 = vpop.f32.mrf.mxu0
    %v1823 = vadd.f32 %v1133, %v1822
    %v1824 = vpop.f32.mrf.mxu0
    %v1825 = vadd.f32 %v1129, %v1824
    %v1826 = vpop.f32.mrf.mxu0
    %v1827 = vadd.f32 %v1133, %v1826
    %1828 = vdwg.mxu0
    %1829 = vmatprep.subr.bf16.mxu0 %v1489
    %1830 = vmatpush1.bf16.msra.mxu0 %v1488
    %1831 = vmatprep.subr.bf16.mxu0 %v1483
    %1832 = vmatpush1.bf16.msra.mxu0 %v1482
    %1833 = vmatprep.subr.bf16.mxu0 %v1477
    %1834 = vmatpush1.bf16.msra.mxu0 %v1476
    %1835 = vmatprep.subr.bf16.mxu0 %v1471
    %1836 = vmatpush1.bf16.msra.mxu0 %v1470
    %1837 = vmatprep.subr.bf16.mxu0 %v1465
    %1838 = vmatpush1.bf16.msra.mxu0 %v1464
    %1839 = vmatprep.subr.bf16.mxu0 %v1459
    %1840 = vmatpush1.bf16.msra.mxu0 %v1458
    %1841 = vmatprep.subr.bf16.mxu0 %v1453
    %1842 = vmatpush1.bf16.msra.mxu0 %v1452
    %1843 = vmatprep.subr.bf16.mxu0 %v1447
    %1844 = vmatpush1.bf16.msra.mxu0 %v1446
    %1845 = vmatprep.subr.bf16.mxu0 %v1537
    %1846 = vmatpush2.bf16.msra.mxu0 %v1536
    %1847 = vmatprep.subr.bf16.mxu0 %v1531
    %1848 = vmatpush2.bf16.msra.mxu0 %v1530
    %1849 = vmatprep.subr.bf16.mxu0 %v1525
    %1850 = vmatpush2.bf16.msra.mxu0 %v1524
    %1851 = vmatprep.subr.bf16.mxu0 %v1519
    %1852 = vmatpush2.bf16.msra.mxu0 %v1518
    %1853 = vmatprep.subr.bf16.mxu0 %v1513
    %1854 = vmatpush2.bf16.msra.mxu0 %v1512
    %1855 = vmatprep.subr.bf16.mxu0 %v1507
    %1856 = vmatpush2.bf16.msra.mxu0 %v1506
    %1857 = vmatprep.subr.bf16.mxu0 %v1501
    %1858 = vmatpush2.bf16.msra.mxu0 %v1500
    %1859 = vmatprep.subr.bf16.mxu0 %v1495
    %1860 = vmatpush2.bf16.msra.mxu0 %v1494
    %1861 = vmatprep.mubr.bf16.mxu0 %v805
    %1862 = vmatmul.mubr.bf16.gmra.mxu0 %v804
    %v1863 = vpop.f32.mrf.mxu0
    %v1864 = vadd.f32 %v1137, %v1863
    %v1865 = vpop.f32.mrf.mxu0
    %v1866 = vadd.f32 %v1141, %v1865
    %v1867 = vpop.f32.mrf.mxu0
    %v1868 = vadd.f32 %v1137, %v1867
    %v1869 = vpop.f32.mrf.mxu0
    %v1870 = vadd.f32 %v1141, %v1869
    %1871 = vmatprep.mubr.bf16.mxu0 %v807
    %1872 = vmatmul.mubr.bf16.gmra.mxu0 %v806
    %v1873 = vpop.f32.mrf.mxu0
    %v1874 = vadd.f32 %v1137, %v1873
    %v1875 = vpop.f32.mrf.mxu0
    %v1876 = vadd.f32 %v1141, %v1875
    %v1877 = vpop.f32.mrf.mxu0
    %v1878 = vadd.f32 %v1137, %v1877
    %v1879 = vpop.f32.mrf.mxu0
    %v1880 = vadd.f32 %v1141, %v1879
    %1881 = vmatprep.mubr.bf16.mxu0 %v809
    %1882 = vmatmul.mubr.bf16.gmra.mxu0 %v808
    %v1883 = vpop.f32.mrf.mxu0
    %v1884 = vadd.f32 %v1137, %v1883
    %v1885 = vpop.f32.mrf.mxu0
    %v1886 = vadd.f32 %v1141, %v1885
    %v1887 = vpop.f32.mrf.mxu0
    %v1888 = vadd.f32 %v1137, %v1887
    %v1889 = vpop.f32.mrf.mxu0
    %v1890 = vadd.f32 %v1141, %v1889
    %1891 = vmatprep.mubr.bf16.mxu0 %v811
    %1892 = vmatmul.mubr.bf16.gmra.mxu0 %v810
    %v1893 = vpop.f32.mrf.mxu0
    %v1894 = vadd.f32 %v1137, %v1893
    %v1895 = vpop.f32.mrf.mxu0
    %v1896 = vadd.f32 %v1141, %v1895
    %v1897 = vpop.f32.mrf.mxu0
    %v1898 = vadd.f32 %v1137, %v1897
    %v1899 = vpop.f32.mrf.mxu0
    %v1900 = vadd.f32 %v1141, %v1899
    %1901 = vmatprep.mubr.bf16.mxu0 %v813
    %1902 = vmatmul.mubr.bf16.gmra.mxu0 %v812
    %v1903 = vpop.f32.mrf.mxu0
    %v1904 = vadd.f32 %v1137, %v1903
    %v1905 = vpop.f32.mrf.mxu0
    %v1906 = vadd.f32 %v1141, %v1905
    %v1907 = vpop.f32.mrf.mxu0
    %v1908 = vadd.f32 %v1137, %v1907
    %v1909 = vpop.f32.mrf.mxu0
    %v1910 = vadd.f32 %v1141, %v1909
    %1911 = vmatprep.mubr.bf16.mxu0 %v815
    %1912 = vmatmul.mubr.bf16.gmra.mxu0 %v814
    %v1913 = vpop.f32.mrf.mxu0
    %v1914 = vadd.f32 %v1137, %v1913
    %v1915 = vpop.f32.mrf.mxu0
    %v1916 = vadd.f32 %v1141, %v1915
    %v1917 = vpop.f32.mrf.mxu0
    %v1918 = vadd.f32 %v1137, %v1917
    %v1919 = vpop.f32.mrf.mxu0
    %v1920 = vadd.f32 %v1141, %v1919
    %1921 = vmatprep.mubr.bf16.mxu0 %v817
    %1922 = vmatmul.mubr.bf16.gmra.mxu0 %v816
    %v1923 = vpop.f32.mrf.mxu0
    %v1924 = vadd.f32 %v1137, %v1923
    %v1925 = vpop.f32.mrf.mxu0
    %v1926 = vadd.f32 %v1141, %v1925
    %v1927 = vpop.f32.mrf.mxu0
    %v1928 = vadd.f32 %v1137, %v1927
    %v1929 = vpop.f32.mrf.mxu0
    %v1930 = vadd.f32 %v1141, %v1929
    %1931 = vmatprep.mubr.bf16.mxu0 %v819
    %1932 = vmatmul.mubr.bf16.gmra.mxu0 %v818
    %v1933 = vpop.f32.mrf.mxu0
    %v1934 = vadd.f32 %v1137, %v1933
    %v1935 = vpop.f32.mrf.mxu0
    %v1936 = vadd.f32 %v1141, %v1935
    %v1937 = vpop.f32.mrf.mxu0
    %v1938 = vadd.f32 %v1137, %v1937
    %v1939 = vpop.f32.mrf.mxu0
    %v1940 = vadd.f32 %v1141, %v1939
    %1941 = vmatprep.mubr.bf16.mxu0 %v821
    %1942 = vmatmul.mubr.bf16.gmra.mxu0 %v820
    %v1943 = vpop.f32.mrf.mxu0
    %v1944 = vadd.f32 %v1137, %v1943
    %v1945 = vpop.f32.mrf.mxu0
    %v1946 = vadd.f32 %v1141, %v1945
    %v1947 = vpop.f32.mrf.mxu0
    %v1948 = vadd.f32 %v1137, %v1947
    %v1949 = vpop.f32.mrf.mxu0
    %v1950 = vadd.f32 %v1141, %v1949
    %1951 = vmatprep.mubr.bf16.mxu0 %v823
    %1952 = vmatmul.mubr.bf16.gmra.mxu0 %v822
    %v1953 = vpop.f32.mrf.mxu0
    %v1954 = vadd.f32 %v1137, %v1953
    %v1955 = vpop.f32.mrf.mxu0
    %v1956 = vadd.f32 %v1141, %v1955
    %v1957 = vpop.f32.mrf.mxu0
    %v1958 = vadd.f32 %v1137, %v1957
    %v1959 = vpop.f32.mrf.mxu0
    %v1960 = vadd.f32 %v1141, %v1959
    %1961 = vmatprep.mubr.bf16.mxu0 %v825
    %1962 = vmatmul.mubr.bf16.gmra.mxu0 %v824
    %v1963 = vpop.f32.mrf.mxu0
    %v1964 = vadd.f32 %v1137, %v1963
    %v1965 = vpop.f32.mrf.mxu0
    %v1966 = vadd.f32 %v1141, %v1965
    %v1967 = vpop.f32.mrf.mxu0
    %v1968 = vadd.f32 %v1137, %v1967
    %v1969 = vpop.f32.mrf.mxu0
    %v1970 = vadd.f32 %v1141, %v1969
    %1971 = vmatprep.mubr.bf16.mxu0 %v827
    %1972 = vmatmul.mubr.bf16.gmra.mxu0 %v826
    %v1973 = vpop.f32.mrf.mxu0
    %v1974 = vadd.f32 %v1137, %v1973
    %v1975 = vpop.f32.mrf.mxu0
    %v1976 = vadd.f32 %v1141, %v1975
    %v1977 = vpop.f32.mrf.mxu0
    %v1978 = vadd.f32 %v1137, %v1977
    %v1979 = vpop.f32.mrf.mxu0
    %v1980 = vadd.f32 %v1141, %v1979
    %1981 = vmatprep.mubr.bf16.mxu0 %v829
    %1982 = vmatmul.mubr.bf16.gmra.mxu0 %v828
    %v1983 = vpop.f32.mrf.mxu0
    %v1984 = vadd.f32 %v1137, %v1983
    %v1985 = vpop.f32.mrf.mxu0
    %v1986 = vadd.f32 %v1141, %v1985
    %v1987 = vpop.f32.mrf.mxu0
    %v1988 = vadd.f32 %v1137, %v1987
    %v1989 = vpop.f32.mrf.mxu0
    %v1990 = vadd.f32 %v1141, %v1989
    %1991 = vmatprep.mubr.bf16.mxu0 %v831
    %1992 = vmatmul.mubr.bf16.gmra.mxu0 %v830
    %v1993 = vpop.f32.mrf.mxu0
    %v1994 = vadd.f32 %v1137, %v1993
    %v1995 = vpop.f32.mrf.mxu0
    %v1996 = vadd.f32 %v1141, %v1995
    %v1997 = vpop.f32.mrf.mxu0
    %v1998 = vadd.f32 %v1137, %v1997
    %v1999 = vpop.f32.mrf.mxu0
    %v2000 = vadd.f32 %v1141, %v1999
    %2001 = vmatprep.mubr.bf16.mxu0 %v833
    %2002 = vmatmul.mubr.bf16.gmra.mxu0 %v832
    %v2003 = vpop.f32.mrf.mxu0
    %v2004 = vadd.f32 %v1137, %v2003
    %v2005 = vpop.f32.mrf.mxu0
    %v2006 = vadd.f32 %v1141, %v2005
    %v2007 = vpop.f32.mrf.mxu0
    %v2008 = vadd.f32 %v1137, %v2007
    %v2009 = vpop.f32.mrf.mxu0
    %v2010 = vadd.f32 %v1141, %v2009
    %2011 = vmatprep.mubr.bf16.mxu0 %v835
    %2012 = vmatmul.mubr.bf16.gmra.mxu0 %v834
    %v2013 = vpop.f32.mrf.mxu0
    %v2014 = vadd.f32 %v1137, %v2013
    %v2015 = vpop.f32.mrf.mxu0
    %v2016 = vadd.f32 %v1141, %v2015
    %v2017 = vpop.f32.mrf.mxu0
    %v2018 = vadd.f32 %v1137, %v2017
    %v2019 = vpop.f32.mrf.mxu0
    %v2020 = vadd.f32 %v1141, %v2019
    %2021 = vdwg.mxu0
    %2022 = vmatprep.subr.bf16.mxu0 %v1491
    %2023 = vmatpush1.bf16.msra.mxu0 %v1490
    %2024 = vmatprep.subr.bf16.mxu0 %v1485
    %2025 = vmatpush1.bf16.msra.mxu0 %v1484
    %2026 = vmatprep.subr.bf16.mxu0 %v1479
    %2027 = vmatpush1.bf16.msra.mxu0 %v1478
    %2028 = vmatprep.subr.bf16.mxu0 %v1473
    %2029 = vmatpush1.bf16.msra.mxu0 %v1472
    %2030 = vmatprep.subr.bf16.mxu0 %v1467
    %2031 = vmatpush1.bf16.msra.mxu0 %v1466
    %2032 = vmatprep.subr.bf16.mxu0 %v1461
    %2033 = vmatpush1.bf16.msra.mxu0 %v1460
    %2034 = vmatprep.subr.bf16.mxu0 %v1455
    %2035 = vmatpush1.bf16.msra.mxu0 %v1454
    %2036 = vmatprep.subr.bf16.mxu0 %v1449
    %2037 = vmatpush1.bf16.msra.mxu0 %v1448
    %2038 = vmatprep.subr.bf16.mxu0 %v1539
    %2039 = vmatpush2.bf16.msra.mxu0 %v1538
    %2040 = vmatprep.subr.bf16.mxu0 %v1533
    %2041 = vmatpush2.bf16.msra.mxu0 %v1532
    %2042 = vmatprep.subr.bf16.mxu0 %v1527
    %2043 = vmatpush2.bf16.msra.mxu0 %v1526
    %2044 = vmatprep.subr.bf16.mxu0 %v1521
    %2045 = vmatpush2.bf16.msra.mxu0 %v1520
    %2046 = vmatprep.subr.bf16.mxu0 %v1515
    %2047 = vmatpush2.bf16.msra.mxu0 %v1514
    %2048 = vmatprep.subr.bf16.mxu0 %v1509
    %2049 = vmatpush2.bf16.msra.mxu0 %v1508
    %2050 = vmatprep.subr.bf16.mxu0 %v1503
    %2051 = vmatpush2.bf16.msra.mxu0 %v1502
    %2052 = vmatprep.subr.bf16.mxu0 %v1497
    %2053 = vmatpush2.bf16.msra.mxu0 %v1496
    %2054 = vmatprep.mubr.bf16.mxu0 %v805
    %2055 = vmatmul.mubr.bf16.gmra.mxu0 %v804
    %v2056 = vpop.f32.mrf.mxu0
    %v2057 = vadd.f32 %v1145, %v2056
    %v2058 = vpop.f32.mrf.mxu0
    %v2059 = vadd.f32 %v1149, %v2058
    %v2060 = vpop.f32.mrf.mxu0
    %v2061 = vadd.f32 %v1145, %v2060
    %v2062 = vpop.f32.mrf.mxu0
    %v2063 = vadd.f32 %v1149, %v2062
    %2064 = vmatprep.mubr.bf16.mxu0 %v807
    %2065 = vmatmul.mubr.bf16.gmra.mxu0 %v806
    %v2066 = vpop.f32.mrf.mxu0
    %v2067 = vadd.f32 %v1145, %v2066
    %v2068 = vpop.f32.mrf.mxu0
    %v2069 = vadd.f32 %v1149, %v2068
    %v2070 = vpop.f32.mrf.mxu0
    %v2071 = vadd.f32 %v1145, %v2070
    %v2072 = vpop.f32.mrf.mxu0
    %v2073 = vadd.f32 %v1149, %v2072
    %2074 = vmatprep.mubr.bf16.mxu0 %v809
    %2075 = vmatmul.mubr.bf16.gmra.mxu0 %v808
    %v2076 = vpop.f32.mrf.mxu0
    %v2077 = vadd.f32 %v1145, %v2076
    %v2078 = vpop.f32.mrf.mxu0
    %v2079 = vadd.f32 %v1149, %v2078
    %v2080 = vpop.f32.mrf.mxu0
    %v2081 = vadd.f32 %v1145, %v2080
    %v2082 = vpop.f32.mrf.mxu0
    %v2083 = vadd.f32 %v1149, %v2082
    %2084 = vmatprep.mubr.bf16.mxu0 %v811
    %2085 = vmatmul.mubr.bf16.gmra.mxu0 %v810
    %v2086 = vpop.f32.mrf.mxu0
    %v2087 = vadd.f32 %v1145, %v2086
    %v2088 = vpop.f32.mrf.mxu0
    %v2089 = vadd.f32 %v1149, %v2088
    %v2090 = vpop.f32.mrf.mxu0
    %v2091 = vadd.f32 %v1145, %v2090
    %v2092 = vpop.f32.mrf.mxu0
    %v2093 = vadd.f32 %v1149, %v2092
    %2094 = vmatprep.mubr.bf16.mxu0 %v813
    %2095 = vmatmul.mubr.bf16.gmra.mxu0 %v812
    %v2096 = vpop.f32.mrf.mxu0
    %v2097 = vadd.f32 %v1145, %v2096
    %v2098 = vpop.f32.mrf.mxu0
    %v2099 = vadd.f32 %v1149, %v2098
    %v2100 = vpop.f32.mrf.mxu0
    %v2101 = vadd.f32 %v1145, %v2100
    %v2102 = vpop.f32.mrf.mxu0
    %v2103 = vadd.f32 %v1149, %v2102
    %2104 = vmatprep.mubr.bf16.mxu0 %v815
    %2105 = vmatmul.mubr.bf16.gmra.mxu0 %v814
    %v2106 = vpop.f32.mrf.mxu0
    %v2107 = vadd.f32 %v1145, %v2106
    %v2108 = vpop.f32.mrf.mxu0
    %v2109 = vadd.f32 %v1149, %v2108
    %v2110 = vpop.f32.mrf.mxu0
    %v2111 = vadd.f32 %v1145, %v2110
    %v2112 = vpop.f32.mrf.mxu0
    %v2113 = vadd.f32 %v1149, %v2112
    %2114 = vmatprep.mubr.bf16.mxu0 %v817
    %2115 = vmatmul.mubr.bf16.gmra.mxu0 %v816
    %v2116 = vpop.f32.mrf.mxu0
    %v2117 = vadd.f32 %v1145, %v2116
    %v2118 = vpop.f32.mrf.mxu0
    %v2119 = vadd.f32 %v1149, %v2118
    %v2120 = vpop.f32.mrf.mxu0
    %v2121 = vadd.f32 %v1145, %v2120
    %v2122 = vpop.f32.mrf.mxu0
    %v2123 = vadd.f32 %v1149, %v2122
    %2124 = vmatprep.mubr.bf16.mxu0 %v819
    %2125 = vmatmul.mubr.bf16.gmra.mxu0 %v818
    %v2126 = vpop.f32.mrf.mxu0
    %v2127 = vadd.f32 %v1145, %v2126
    %v2128 = vpop.f32.mrf.mxu0
    %v2129 = vadd.f32 %v1149, %v2128
    %v2130 = vpop.f32.mrf.mxu0
    %v2131 = vadd.f32 %v1145, %v2130
    %v2132 = vpop.f32.mrf.mxu0
    %v2133 = vadd.f32 %v1149, %v2132
    %2134 = vmatprep.mubr.bf16.mxu0 %v821
    %2135 = vmatmul.mubr.bf16.gmra.mxu0 %v820
    %v2136 = vpop.f32.mrf.mxu0
    %v2137 = vadd.f32 %v1145, %v2136
    %v2138 = vpop.f32.mrf.mxu0
    %v2139 = vadd.f32 %v1149, %v2138
    %v2140 = vpop.f32.mrf.mxu0
    %v2141 = vadd.f32 %v1145, %v2140
    %v2142 = vpop.f32.mrf.mxu0
    %v2143 = vadd.f32 %v1149, %v2142
    %2144 = vmatprep.mubr.bf16.mxu0 %v823
    %2145 = vmatmul.mubr.bf16.gmra.mxu0 %v822
    %v2146 = vpop.f32.mrf.mxu0
    %v2147 = vadd.f32 %v1145, %v2146
    %v2148 = vpop.f32.mrf.mxu0
    %v2149 = vadd.f32 %v1149, %v2148
    %v2150 = vpop.f32.mrf.mxu0
    %v2151 = vadd.f32 %v1145, %v2150
    %v2152 = vpop.f32.mrf.mxu0
    %v2153 = vadd.f32 %v1149, %v2152
    %2154 = vmatprep.mubr.bf16.mxu0 %v825
    %2155 = vmatmul.mubr.bf16.gmra.mxu0 %v824
    %v2156 = vpop.f32.mrf.mxu0
    %v2157 = vadd.f32 %v1145, %v2156
    %v2158 = vpop.f32.mrf.mxu0
    %v2159 = vadd.f32 %v1149, %v2158
    %v2160 = vpop.f32.mrf.mxu0
    %v2161 = vadd.f32 %v1145, %v2160
    %v2162 = vpop.f32.mrf.mxu0
    %v2163 = vadd.f32 %v1149, %v2162
    %2164 = vmatprep.mubr.bf16.mxu0 %v827
    %2165 = vmatmul.mubr.bf16.gmra.mxu0 %v826
    %v2166 = vpop.f32.mrf.mxu0
    %v2167 = vadd.f32 %v1145, %v2166
    %v2168 = vpop.f32.mrf.mxu0
    %v2169 = vadd.f32 %v1149, %v2168
    %v2170 = vpop.f32.mrf.mxu0
    %v2171 = vadd.f32 %v1145, %v2170
    %v2172 = vpop.f32.mrf.mxu0
    %v2173 = vadd.f32 %v1149, %v2172
    %2174 = vmatprep.mubr.bf16.mxu0 %v829
    %2175 = vmatmul.mubr.bf16.gmra.mxu0 %v828
    %v2176 = vpop.f32.mrf.mxu0
    %v2177 = vadd.f32 %v1145, %v2176
    %v2178 = vpop.f32.mrf.mxu0
    %v2179 = vadd.f32 %v1149, %v2178
    %v2180 = vpop.f32.mrf.mxu0
    %v2181 = vadd.f32 %v1145, %v2180
    %v2182 = vpop.f32.mrf.mxu0
    %v2183 = vadd.f32 %v1149, %v2182
    %2184 = vmatprep.mubr.bf16.mxu0 %v831
    %2185 = vmatmul.mubr.bf16.gmra.mxu0 %v830
    %v2186 = vpop.f32.mrf.mxu0
    %v2187 = vadd.f32 %v1145, %v2186
    %v2188 = vpop.f32.mrf.mxu0
    %v2189 = vadd.f32 %v1149, %v2188
    %v2190 = vpop.f32.mrf.mxu0
    %v2191 = vadd.f32 %v1145, %v2190
    %v2192 = vpop.f32.mrf.mxu0
    %v2193 = vadd.f32 %v1149, %v2192
    %2194 = vmatprep.mubr.bf16.mxu0 %v833
    %2195 = vmatmul.mubr.bf16.gmra.mxu0 %v832
    %v2196 = vpop.f32.mrf.mxu0
    %v2197 = vadd.f32 %v1145, %v2196
    %v2198 = vpop.f32.mrf.mxu0
    %v2199 = vadd.f32 %v1149, %v2198
    %v2200 = vpop.f32.mrf.mxu0
    %v2201 = vadd.f32 %v1145, %v2200
    %v2202 = vpop.f32.mrf.mxu0
    %v2203 = vadd.f32 %v1149, %v2202
    %2204 = vmatprep.mubr.bf16.mxu0 %v835
    %2205 = vmatmul.mubr.bf16.gmra.mxu0 %v834
    %v2206 = vpop.f32.mrf.mxu0
    %v2207 = vadd.f32 %v1145, %v2206
    %v2208 = vpop.f32.mrf.mxu0
    %v2209 = vadd.f32 %v1149, %v2208
    %v2210 = vpop.f32.mrf.mxu0
    %v2211 = vadd.f32 %v1145, %v2210
    %v2212 = vpop.f32.mrf.mxu0
    %v2213 = vadd.f32 %v1149, %v2212
    %2214 = vdwg.mxu0
    %v2215 = vpack.c.bf16 %v1675, %v1671
    %v2216 = vpack.c.bf16 %v1677, %v1673
    %v2217 = vpack.c.bf16 %v1868, %v1864
    %v2218 = vpack.c.bf16 %v1870, %v1866
    %v2219 = vpack.c.bf16 %v2061, %v2057
    %v2220 = vpack.c.bf16 %v2063, %v2059
    %v2221 = vpack.c.bf16 %v1685, %v1681
    %v2222 = vpack.c.bf16 %v1687, %v1683
    %v2223 = vpack.c.bf16 %v1878, %v1874
    %v2224 = vpack.c.bf16 %v1880, %v1876
    %v2225 = vpack.c.bf16 %v2071, %v2067
    %v2226 = vpack.c.bf16 %v2073, %v2069
    %v2227 = vpack.c.bf16 %v1695, %v1691
    %v2228 = vpack.c.bf16 %v1697, %v1693
    %v2229 = vpack.c.bf16 %v1888, %v1884
    %v2230 = vpack.c.bf16 %v1890, %v1886
    %v2231 = vpack.c.bf16 %v2081, %v2077
    %v2232 = vpack.c.bf16 %v2083, %v2079
    %v2233 = vpack.c.bf16 %v1705, %v1701
    %v2234 = vpack.c.bf16 %v1707, %v1703
    %v2235 = vpack.c.bf16 %v1898, %v1894
    %v2236 = vpack.c.bf16 %v1900, %v1896
    %v2237 = vpack.c.bf16 %v2091, %v2087
    %v2238 = vpack.c.bf16 %v2093, %v2089
    %v2239 = vpack.c.bf16 %v1715, %v1711
    %v2240 = vpack.c.bf16 %v1717, %v1713
    %v2241 = vpack.c.bf16 %v1908, %v1904
    %v2242 = vpack.c.bf16 %v1910, %v1906
    %v2243 = vpack.c.bf16 %v2101, %v2097
    %v2244 = vpack.c.bf16 %v2103, %v2099
    %v2245 = vpack.c.bf16 %v1725, %v1721
    %v2246 = vpack.c.bf16 %v1727, %v1723
    %v2247 = vpack.c.bf16 %v1918, %v1914
    %v2248 = vpack.c.bf16 %v1920, %v1916
    %v2249 = vpack.c.bf16 %v2111, %v2107
    %v2250 = vpack.c.bf16 %v2113, %v2109
    %v2251 = vpack.c.bf16 %v1735, %v1731
    %v2252 = vpack.c.bf16 %v1737, %v1733
    %v2253 = vpack.c.bf16 %v1928, %v1924
    %v2254 = vpack.c.bf16 %v1930, %v1926
    %v2255 = vpack.c.bf16 %v2121, %v2117
    %v2256 = vpack.c.bf16 %v2123, %v2119
    %v2257 = vpack.c.bf16 %v1745, %v1741
    %v2258 = vpack.c.bf16 %v1747, %v1743
    %v2259 = vpack.c.bf16 %v1938, %v1934
    %v2260 = vpack.c.bf16 %v1940, %v1936
    %v2261 = vpack.c.bf16 %v2131, %v2127
    %v2262 = vpack.c.bf16 %v2133, %v2129
    %v2263 = vpack.c.bf16 %v1755, %v1751
    %v2264 = vpack.c.bf16 %v1757, %v1753
    %v2265 = vpack.c.bf16 %v1948, %v1944
    %v2266 = vpack.c.bf16 %v1950, %v1946
    %v2267 = vpack.c.bf16 %v2141, %v2137
    %v2268 = vpack.c.bf16 %v2143, %v2139
    %v2269 = vpack.c.bf16 %v1765, %v1761
    %v2270 = vpack.c.bf16 %v1767, %v1763
    %v2271 = vpack.c.bf16 %v1958, %v1954
    %v2272 = vpack.c.bf16 %v1960, %v1956
    %v2273 = vpack.c.bf16 %v2151, %v2147
    %v2274 = vpack.c.bf16 %v2153, %v2149
    %v2275 = vpack.c.bf16 %v1775, %v1771
    %v2276 = vpack.c.bf16 %v1777, %v1773
    %v2277 = vpack.c.bf16 %v1968, %v1964
    %v2278 = vpack.c.bf16 %v1970, %v1966
    %v2279 = vpack.c.bf16 %v2161, %v2157
    %v2280 = vpack.c.bf16 %v2163, %v2159
    %v2281 = vpack.c.bf16 %v1785, %v1781
    %v2282 = vpack.c.bf16 %v1787, %v1783
    %v2283 = vpack.c.bf16 %v1978, %v1974
    %v2284 = vpack.c.bf16 %v1980, %v1976
    %v2285 = vpack.c.bf16 %v2171, %v2167
    %v2286 = vpack.c.bf16 %v2173, %v2169
    %v2287 = vpack.c.bf16 %v1795, %v1791
    %v2288 = vpack.c.bf16 %v1797, %v1793
    %v2289 = vpack.c.bf16 %v1988, %v1984
    %v2290 = vpack.c.bf16 %v1990, %v1986
    %v2291 = vpack.c.bf16 %v2181, %v2177
    %v2292 = vpack.c.bf16 %v2183, %v2179
    %v2293 = vpack.c.bf16 %v1805, %v1801
    %v2294 = vpack.c.bf16 %v1807, %v1803
    %v2295 = vpack.c.bf16 %v1998, %v1994
    %v2296 = vpack.c.bf16 %v2000, %v1996
    %v2297 = vpack.c.bf16 %v2191, %v2187
    %v2298 = vpack.c.bf16 %v2193, %v2189
    %v2299 = vpack.c.bf16 %v1815, %v1811
    %v2300 = vpack.c.bf16 %v1817, %v1813
    %v2301 = vpack.c.bf16 %v2008, %v2004
    %v2302 = vpack.c.bf16 %v2010, %v2006
    %v2303 = vpack.c.bf16 %v2201, %v2197
    %v2304 = vpack.c.bf16 %v2203, %v2199
    %v2305 = vpack.c.bf16 %v1825, %v1821
    %v2306 = vpack.c.bf16 %v1827, %v1823
    %v2307 = vpack.c.bf16 %v2018, %v2014
    %v2308 = vpack.c.bf16 %v2020, %v2016
    %v2309 = vpack.c.bf16 %v2211, %v2207
    %v2310 = vpack.c.bf16 %v2213, %v2209
    %v2407 = vunpack.c.l.b16 %v2215
    %v2408 = vunpack.c.l.b16 %v2216
    %v2409 = vunpack.c.l.b16 %v2217
    %v2410 = vunpack.c.l.b16 %v2218
    %v2411 = vunpack.c.l.b16 %v2219
    %v2412 = vunpack.c.l.b16 %v2220
    %v2413 = vunpack.c.h.b16 %v2215
    %v2414 = vunpack.c.h.b16 %v2216
    %v2415 = vunpack.c.h.b16 %v2217
    %v2416 = vunpack.c.h.b16 %v2218
    %v2417 = vunpack.c.h.b16 %v2219
    %v2418 = vunpack.c.h.b16 %v2220
    %v2419 = vunpack.c.l.b16 %v2221
    %v2420 = vunpack.c.l.b16 %v2222
    %v2421 = vunpack.c.l.b16 %v2223
    %v2422 = vunpack.c.l.b16 %v2224
    %v2423 = vunpack.c.l.b16 %v2225
    %v2424 = vunpack.c.l.b16 %v2226
    %v2425 = vunpack.c.h.b16 %v2221
    %v2426 = vunpack.c.h.b16 %v2222
    %v2427 = vunpack.c.h.b16 %v2223
    %v2428 = vunpack.c.h.b16 %v2224
    %v2429 = vunpack.c.h.b16 %v2225
    %v2430 = vunpack.c.h.b16 %v2226
    %v2431 = vunpack.c.l.b16 %v2227
    %v2432 = vunpack.c.l.b16 %v2228
    %v2433 = vunpack.c.l.b16 %v2229
    %v2434 = vunpack.c.l.b16 %v2230
    %v2435 = vunpack.c.l.b16 %v2231
    %v2436 = vunpack.c.l.b16 %v2232
    %v2437 = vunpack.c.h.b16 %v2227
    %v2438 = vunpack.c.h.b16 %v2228
    %v2439 = vunpack.c.h.b16 %v2229
    %v2440 = vunpack.c.h.b16 %v2230
    %v2441 = vunpack.c.h.b16 %v2231
    %v2442 = vunpack.c.h.b16 %v2232
    %v2443 = vunpack.c.l.b16 %v2233
    %v2444 = vunpack.c.l.b16 %v2234
    %v2445 = vunpack.c.l.b16 %v2235
    %v2446 = vunpack.c.l.b16 %v2236
    %v2447 = vunpack.c.l.b16 %v2237
    %v2448 = vunpack.c.l.b16 %v2238
    %v2449 = vunpack.c.h.b16 %v2233
    %v2450 = vunpack.c.h.b16 %v2234
    %v2451 = vunpack.c.h.b16 %v2235
    %v2452 = vunpack.c.h.b16 %v2236
    %v2453 = vunpack.c.h.b16 %v2237
    %v2454 = vunpack.c.h.b16 %v2238
    %v2455 = vunpack.c.l.b16 %v2239
    %v2456 = vunpack.c.l.b16 %v2240
    %v2457 = vunpack.c.l.b16 %v2241
    %v2458 = vunpack.c.l.b16 %v2242
    %v2459 = vunpack.c.l.b16 %v2243
    %v2460 = vunpack.c.l.b16 %v2244
    %v2461 = vunpack.c.h.b16 %v2239
    %v2462 = vunpack.c.h.b16 %v2240
    %v2463 = vunpack.c.h.b16 %v2241
    %v2464 = vunpack.c.h.b16 %v2242
    %v2465 = vunpack.c.h.b16 %v2243
    %v2466 = vunpack.c.h.b16 %v2244
    %v2467 = vunpack.c.l.b16 %v2245
    %v2468 = vunpack.c.l.b16 %v2246
    %v2469 = vunpack.c.l.b16 %v2247
    %v2470 = vunpack.c.l.b16 %v2248
    %v2471 = vunpack.c.l.b16 %v2249
    %v2472 = vunpack.c.l.b16 %v2250
    %v2473 = vunpack.c.h.b16 %v2245
    %v2474 = vunpack.c.h.b16 %v2246
    %v2475 = vunpack.c.h.b16 %v2247
    %v2476 = vunpack.c.h.b16 %v2248
    %v2477 = vunpack.c.h.b16 %v2249
    %v2478 = vunpack.c.h.b16 %v2250
    %v2479 = vunpack.c.l.b16 %v2251
    %v2480 = vunpack.c.l.b16 %v2252
    %v2481 = vunpack.c.l.b16 %v2253
    %v2482 = vunpack.c.l.b16 %v2254
    %v2483 = vunpack.c.l.b16 %v2255
    %v2484 = vunpack.c.l.b16 %v2256
    %v2485 = vunpack.c.h.b16 %v2251
    %v2486 = vunpack.c.h.b16 %v2252
    %v2487 = vunpack.c.h.b16 %v2253
    %v2488 = vunpack.c.h.b16 %v2254
    %v2489 = vunpack.c.h.b16 %v2255
    %v2490 = vunpack.c.h.b16 %v2256
    %v2491 = vunpack.c.l.b16 %v2257
    %v2492 = vunpack.c.l.b16 %v2258
    %v2493 = vunpack.c.l.b16 %v2259
    %v2494 = vunpack.c.l.b16 %v2260
    %v2495 = vunpack.c.l.b16 %v2261
    %v2496 = vunpack.c.l.b16 %v2262
    %v2497 = vunpack.c.h.b16 %v2257
    %v2498 = vunpack.c.h.b16 %v2258
    %v2499 = vunpack.c.h.b16 %v2259
    %v2500 = vunpack.c.h.b16 %v2260
    %v2501 = vunpack.c.h.b16 %v2261
    %v2502 = vunpack.c.h.b16 %v2262
    %v2503 = vunpack.c.l.b16 %v2263
    %v2504 = vunpack.c.l.b16 %v2264
    %v2505 = vunpack.c.l.b16 %v2265
    %v2506 = vunpack.c.l.b16 %v2266
    %v2507 = vunpack.c.l.b16 %v2267
    %v2508 = vunpack.c.l.b16 %v2268
    %v2509 = vunpack.c.h.b16 %v2263
    %v2510 = vunpack.c.h.b16 %v2264
    %v2511 = vunpack.c.h.b16 %v2265
    %v2512 = vunpack.c.h.b16 %v2266
    %v2513 = vunpack.c.h.b16 %v2267
    %v2514 = vunpack.c.h.b16 %v2268
    %v2515 = vunpack.c.l.b16 %v2269
    %v2516 = vunpack.c.l.b16 %v2270
    %v2517 = vunpack.c.l.b16 %v2271
    %v2518 = vunpack.c.l.b16 %v2272
    %v2519 = vunpack.c.l.b16 %v2273
    %v2520 = vunpack.c.l.b16 %v2274
    %v2521 = vunpack.c.h.b16 %v2269
    %v2522 = vunpack.c.h.b16 %v2270
    %v2523 = vunpack.c.h.b16 %v2271
    %v2524 = vunpack.c.h.b16 %v2272
    %v2525 = vunpack.c.h.b16 %v2273
    %v2526 = vunpack.c.h.b16 %v2274
    %v2527 = vunpack.c.l.b16 %v2275
    %v2528 = vunpack.c.l.b16 %v2276
    %v2529 = vunpack.c.l.b16 %v2277
    %v2530 = vunpack.c.l.b16 %v2278
    %v2531 = vunpack.c.l.b16 %v2279
    %v2532 = vunpack.c.l.b16 %v2280
    %v2533 = vunpack.c.h.b16 %v2275
    %v2534 = vunpack.c.h.b16 %v2276
    %v2535 = vunpack.c.h.b16 %v2277
    %v2536 = vunpack.c.h.b16 %v2278
    %v2537 = vunpack.c.h.b16 %v2279
    %v2538 = vunpack.c.h.b16 %v2280
    %v2539 = vunpack.c.l.b16 %v2281
    %v2540 = vunpack.c.l.b16 %v2282
    %v2541 = vunpack.c.l.b16 %v2283
    %v2542 = vunpack.c.l.b16 %v2284
    %v2543 = vunpack.c.l.b16 %v2285
    %v2544 = vunpack.c.l.b16 %v2286
    %v2545 = vunpack.c.h.b16 %v2281
    %v2546 = vunpack.c.h.b16 %v2282
    %v2547 = vunpack.c.h.b16 %v2283
    %v2548 = vunpack.c.h.b16 %v2284
    %v2549 = vunpack.c.h.b16 %v2285
    %v2550 = vunpack.c.h.b16 %v2286
    %v2551 = vunpack.c.l.b16 %v2287
    %v2552 = vunpack.c.l.b16 %v2288
    %v2553 = vunpack.c.l.b16 %v2289
    %v2554 = vunpack.c.l.b16 %v2290
    %v2555 = vunpack.c.l.b16 %v2291
    %v2556 = vunpack.c.l.b16 %v2292
    %v2557 = vunpack.c.h.b16 %v2287
    %v2558 = vunpack.c.h.b16 %v2288
    %v2559 = vunpack.c.h.b16 %v2289
    %v2560 = vunpack.c.h.b16 %v2290
    %v2561 = vunpack.c.h.b16 %v2291
    %v2562 = vunpack.c.h.b16 %v2292
    %v2563 = vunpack.c.l.b16 %v2293
    %v2564 = vunpack.c.l.b16 %v2294
    %v2565 = vunpack.c.l.b16 %v2295
    %v2566 = vunpack.c.l.b16 %v2296
    %v2567 = vunpack.c.l.b16 %v2297
    %v2568 = vunpack.c.l.b16 %v2298
    %v2569 = vunpack.c.h.b16 %v2293
    %v2570 = vunpack.c.h.b16 %v2294
    %v2571 = vunpack.c.h.b16 %v2295
    %v2572 = vunpack.c.h.b16 %v2296
    %v2573 = vunpack.c.h.b16 %v2297
    %v2574 = vunpack.c.h.b16 %v2298
    %v2575 = vunpack.c.l.b16 %v2299
    %v2576 = vunpack.c.l.b16 %v2300
    %v2577 = vunpack.c.l.b16 %v2301
    %v2578 = vunpack.c.l.b16 %v2302
    %v2579 = vunpack.c.l.b16 %v2303
    %v2580 = vunpack.c.l.b16 %v2304
    %v2581 = vunpack.c.h.b16 %v2299
    %v2582 = vunpack.c.h.b16 %v2300
    %v2583 = vunpack.c.h.b16 %v2301
    %v2584 = vunpack.c.h.b16 %v2302
    %v2585 = vunpack.c.h.b16 %v2303
    %v2586 = vunpack.c.h.b16 %v2304
    %v2587 = vunpack.c.l.b16 %v2305
    %v2588 = vunpack.c.l.b16 %v2306
    %v2589 = vunpack.c.l.b16 %v2307
    %v2590 = vunpack.c.l.b16 %v2308
    %v2591 = vunpack.c.l.b16 %v2309
    %v2592 = vunpack.c.l.b16 %v2310
    %v2593 = vunpack.c.h.b16 %v2305
    %v2594 = vunpack.c.h.b16 %v2306
    %v2595 = vunpack.c.h.b16 %v2307
    %v2596 = vunpack.c.h.b16 %v2308
    %v2597 = vunpack.c.h.b16 %v2309
    %v2598 = vunpack.c.h.b16 %v2310
    %v2599 = vpack.c.b16 %v2408, %v2407
    %v2600 = vpack.c.b16 %v2410, %v2409
    %v2601 = vpack.c.b16 %v2412, %v2411
    %v2602 = vpack.c.b16 %v2414, %v2413
    %v2603 = vpack.c.b16 %v2416, %v2415
    %v2604 = vpack.c.b16 %v2418, %v2417
    %v2605 = vpack.c.b16 %v2420, %v2419
    %v2606 = vpack.c.b16 %v2422, %v2421
    %v2607 = vpack.c.b16 %v2424, %v2423
    %v2608 = vpack.c.b16 %v2426, %v2425
    %v2609 = vpack.c.b16 %v2428, %v2427
    %v2610 = vpack.c.b16 %v2430, %v2429
    %v2611 = vpack.c.b16 %v2432, %v2431
    %v2612 = vpack.c.b16 %v2434, %v2433
    %v2613 = vpack.c.b16 %v2436, %v2435
    %v2614 = vpack.c.b16 %v2438, %v2437
    %v2615 = vpack.c.b16 %v2440, %v2439
    %v2616 = vpack.c.b16 %v2442, %v2441
    %v2617 = vpack.c.b16 %v2444, %v2443
    %v2618 = vpack.c.b16 %v2446, %v2445
    %v2619 = vpack.c.b16 %v2448, %v2447
    %v2620 = vpack.c.b16 %v2450, %v2449
    %v2621 = vpack.c.b16 %v2452, %v2451
    %v2622 = vpack.c.b16 %v2454, %v2453
    %v2623 = vpack.c.b16 %v2456, %v2455
    %v2624 = vpack.c.b16 %v2458, %v2457
    %v2625 = vpack.c.b16 %v2460, %v2459
    %v2626 = vpack.c.b16 %v2462, %v2461
    %v2627 = vpack.c.b16 %v2464, %v2463
    %v2628 = vpack.c.b16 %v2466, %v2465
    %v2629 = vpack.c.b16 %v2468, %v2467
    %v2630 = vpack.c.b16 %v2470, %v2469
    %v2631 = vpack.c.b16 %v2472, %v2471
    %v2632 = vpack.c.b16 %v2474, %v2473
    %v2633 = vpack.c.b16 %v2476, %v2475
    %v2634 = vpack.c.b16 %v2478, %v2477
    %v2635 = vpack.c.b16 %v2480, %v2479
    %v2636 = vpack.c.b16 %v2482, %v2481
    %v2637 = vpack.c.b16 %v2484, %v2483
    %v2638 = vpack.c.b16 %v2486, %v2485
    %v2639 = vpack.c.b16 %v2488, %v2487
    %v2640 = vpack.c.b16 %v2490, %v2489
    %v2641 = vpack.c.b16 %v2492, %v2491
    %v2642 = vpack.c.b16 %v2494, %v2493
    %v2643 = vpack.c.b16 %v2496, %v2495
    %v2644 = vpack.c.b16 %v2498, %v2497
    %v2645 = vpack.c.b16 %v2500, %v2499
    %v2646 = vpack.c.b16 %v2502, %v2501
    %v2647 = vpack.c.b16 %v2504, %v2503
    %v2648 = vpack.c.b16 %v2506, %v2505
    %v2649 = vpack.c.b16 %v2508, %v2507
    %v2650 = vpack.c.b16 %v2510, %v2509
    %v2651 = vpack.c.b16 %v2512, %v2511
    %v2652 = vpack.c.b16 %v2514, %v2513
    %v2653 = vpack.c.b16 %v2516, %v2515
    %v2654 = vpack.c.b16 %v2518, %v2517
    %v2655 = vpack.c.b16 %v2520, %v2519
    %v2656 = vpack.c.b16 %v2522, %v2521
    %v2657 = vpack.c.b16 %v2524, %v2523
    %v2658 = vpack.c.b16 %v2526, %v2525
    %v2659 = vpack.c.b16 %v2528, %v2527
    %v2660 = vpack.c.b16 %v2530, %v2529
    %v2661 = vpack.c.b16 %v2532, %v2531
    %v2662 = vpack.c.b16 %v2534, %v2533
    %v2663 = vpack.c.b16 %v2536, %v2535
    %v2664 = vpack.c.b16 %v2538, %v2537
    %v2665 = vpack.c.b16 %v2540, %v2539
    %v2666 = vpack.c.b16 %v2542, %v2541
    %v2667 = vpack.c.b16 %v2544, %v2543
    %v2668 = vpack.c.b16 %v2546, %v2545
    %v2669 = vpack.c.b16 %v2548, %v2547
    %v2670 = vpack.c.b16 %v2550, %v2549
    %v2671 = vpack.c.b16 %v2552, %v2551
    %v2672 = vpack.c.b16 %v2554, %v2553
    %v2673 = vpack.c.b16 %v2556, %v2555
    %v2674 = vpack.c.b16 %v2558, %v2557
    %v2675 = vpack.c.b16 %v2560, %v2559
    %v2676 = vpack.c.b16 %v2562, %v2561
    %v2677 = vpack.c.b16 %v2564, %v2563
    %v2678 = vpack.c.b16 %v2566, %v2565
    %v2679 = vpack.c.b16 %v2568, %v2567
    %v2680 = vpack.c.b16 %v2570, %v2569
    %v2681 = vpack.c.b16 %v2572, %v2571
    %v2682 = vpack.c.b16 %v2574, %v2573
    %v2683 = vpack.c.b16 %v2576, %v2575
    %v2684 = vpack.c.b16 %v2578, %v2577
    %v2685 = vpack.c.b16 %v2580, %v2579
    %v2686 = vpack.c.b16 %v2582, %v2581
    %v2687 = vpack.c.b16 %v2584, %v2583
    %v2688 = vpack.c.b16 %v2586, %v2585
    %v2689 = vpack.c.b16 %v2588, %v2587
    %v2690 = vpack.c.b16 %v2590, %v2589
    %v2691 = vpack.c.b16 %v2592, %v2591
    %v2692 = vpack.c.b16 %v2594, %v2593
    %v2693 = vpack.c.b16 %v2596, %v2595
    %v2694 = vpack.c.b16 %v2598, %v2597
    %2791 = vst [vmem:[#allocation11] sm:$0xff] %v2599
    %2792 = vst [vmem:[#allocation11 + $0x8] sm:$0xff] %v2600
    %2793 = vst [vmem:[#allocation11 + $0x10] sm:$0xff] %v2601
    %2794 = vst [vmem:[#allocation11 + $0x18] sm:$0xff] %v2602
    %2795 = vst [vmem:[#allocation11 + $0x20] sm:$0xff] %v2603
    %2796 = vst [vmem:[#allocation11 + $0x28] sm:$0xff] %v2604
    %2797 = vst [vmem:[#allocation11 + $0x30] sm:$0xff] %v2605
    %2798 = vst [vmem:[#allocation11 + $0x38] sm:$0xff] %v2606
    %2799 = vst [vmem:[#allocation11 + $0x40] sm:$0xff] %v2607
    %2800 = vst [vmem:[#allocation11 + $0x48] sm:$0xff] %v2608
    %2801 = vst [vmem:[#allocation11 + $0x50] sm:$0xff] %v2609
    %2802 = vst [vmem:[#allocation11 + $0x58] sm:$0xff] %v2610
    %2803 = vst [vmem:[#allocation11 + $0x60] sm:$0xff] %v2611
    %2804 = vst [vmem:[#allocation11 + $0x68] sm:$0xff] %v2612
    %2805 = vst [vmem:[#allocation11 + $0x70] sm:$0xff] %v2613
    %2806 = vst [vmem:[#allocation11 + $0x78] sm:$0xff] %v2614
    %2807 = vst [vmem:[#allocation11 + $0x80] sm:$0xff] %v2615
    %2808 = vst [vmem:[#allocation11 + $0x88] sm:$0xff] %v2616
    %2809 = vst [vmem:[#allocation11 + $0x90] sm:$0xff] %v2617
    %2810 = vst [vmem:[#allocation11 + $0x98] sm:$0xff] %v2618
    %2811 = vst [vmem:[#allocation11 + $0xa0] sm:$0xff] %v2619
    %2812 = vst [vmem:[#allocation11 + $0xa8] sm:$0xff] %v2620
    %2813 = vst [vmem:[#allocation11 + $0xb0] sm:$0xff] %v2621
    %2814 = vst [vmem:[#allocation11 + $0xb8] sm:$0xff] %v2622
    %2815 = vst [vmem:[#allocation11 + $0xc0] sm:$0xff] %v2623
    %2816 = vst [vmem:[#allocation11 + $0xc8] sm:$0xff] %v2624
    %2817 = vst [vmem:[#allocation11 + $0xd0] sm:$0xff] %v2625
    %2818 = vst [vmem:[#allocation11 + $0xd8] sm:$0xff] %v2626
    %2819 = vst [vmem:[#allocation11 + $0xe0] sm:$0xff] %v2627
    %2820 = vst [vmem:[#allocation11 + $0xe8] sm:$0xff] %v2628
    %2821 = vst [vmem:[#allocation11 + $0xf0] sm:$0xff] %v2629
    %2822 = vst [vmem:[#allocation11 + $0xf8] sm:$0xff] %v2630
    %2823 = vst [vmem:[#allocation11 + $0x100] sm:$0xff] %v2631
    %2824 = vst [vmem:[#allocation11 + $0x108] sm:$0xff] %v2632
    %2825 = vst [vmem:[#allocation11 + $0x110] sm:$0xff] %v2633
    %2826 = vst [vmem:[#allocation11 + $0x118] sm:$0xff] %v2634
    %2827 = vst [vmem:[#allocation11 + $0x120] sm:$0xff] %v2635
    %2828 = vst [vmem:[#allocation11 + $0x128] sm:$0xff] %v2636
    %2829 = vst [vmem:[#allocation11 + $0x130] sm:$0xff] %v2637
    %2830 = vst [vmem:[#allocation11 + $0x138] sm:$0xff] %v2638
    %2831 = vst [vmem:[#allocation11 + $0x140] sm:$0xff] %v2639
    %2832 = vst [vmem:[#allocation11 + $0x148] sm:$0xff] %v2640
    %2833 = vst [vmem:[#allocation11 + $0x150] sm:$0xff] %v2641
    %2834 = vst [vmem:[#allocation11 + $0x158] sm:$0xff] %v2642
    %2835 = vst [vmem:[#allocation11 + $0x160] sm:$0xff] %v2643
    %2836 = vst [vmem:[#allocation11 + $0x168] sm:$0xff] %v2644
    %2837 = vst [vmem:[#allocation11 + $0x170] sm:$0xff] %v2645
    %2838 = vst [vmem:[#allocation11 + $0x178] sm:$0xff] %v2646
    %2839 = vst [vmem:[#allocation11 + $0x180] sm:$0xff] %v2647
    %2840 = vst [vmem:[#allocation11 + $0x188] sm:$0xff] %v2648
    %2841 = vst [vmem:[#allocation11 + $0x190] sm:$0xff] %v2649
    %2842 = vst [vmem:[#allocation11 + $0x198] sm:$0xff] %v2650
    %2843 = vst [vmem:[#allocation11 + $0x1a0] sm:$0xff] %v2651
    %2844 = vst [vmem:[#allocation11 + $0x1a8] sm:$0xff] %v2652
    %2845 = vst [vmem:[#allocation11 + $0x1b0] sm:$0xff] %v2653
    %2846 = vst [vmem:[#allocation11 + $0x1b8] sm:$0xff] %v2654
    %2847 = vst [vmem:[#allocation11 + $0x1c0] sm:$0xff] %v2655
    %2848 = vst [vmem:[#allocation11 + $0x1c8] sm:$0xff] %v2656
    %2849 = vst [vmem:[#allocation11 + $0x1d0] sm:$0xff] %v2657
    %2850 = vst [vmem:[#allocation11 + $0x1d8] sm:$0xff] %v2658
    %2851 = vst [vmem:[#allocation11 + $0x1e0] sm:$0xff] %v2659
    %2852 = vst [vmem:[#allocation11 + $0x1e8] sm:$0xff] %v2660
    %2853 = vst [vmem:[#allocation11 + $0x1f0] sm:$0xff] %v2661
    %2854 = vst [vmem:[#allocation11 + $0x1f8] sm:$0xff] %v2662
    %2855 = vst [vmem:[#allocation11 + $0x200] sm:$0xff] %v2663
    %2856 = vst [vmem:[#allocation11 + $0x208] sm:$0xff] %v2664
    %2857 = vst [vmem:[#allocation11 + $0x210] sm:$0xff] %v2665
    %2858 = vst [vmem:[#allocation11 + $0x218] sm:$0xff] %v2666
    %2859 = vst [vmem:[#allocation11 + $0x220] sm:$0xff] %v2667
    %2860 = vst [vmem:[#allocation11 + $0x228] sm:$0xff] %v2668
    %2861 = vst [vmem:[#allocation11 + $0x230] sm:$0xff] %v2669
    %2862 = vst [vmem:[#allocation11 + $0x238] sm:$0xff] %v2670
    %2863 = vst [vmem:[#allocation11 + $0x240] sm:$0xff] %v2671
    %2864 = vst [vmem:[#allocation11 + $0x248] sm:$0xff] %v2672
    %2865 = vst [vmem:[#allocation11 + $0x250] sm:$0xff] %v2673
    %2866 = vst [vmem:[#allocation11 + $0x258] sm:$0xff] %v2674
    %2867 = vst [vmem:[#allocation11 + $0x260] sm:$0xff] %v2675
    %2868 = vst [vmem:[#allocation11 + $0x268] sm:$0xff] %v2676
    %2869 = vst [vmem:[#allocation11 + $0x270] sm:$0xff] %v2677
    %2870 = vst [vmem:[#allocation11 + $0x278] sm:$0xff] %v2678
    %2871 = vst [vmem:[#allocation11 + $0x280] sm:$0xff] %v2679
    %2872 = vst [vmem:[#allocation11 + $0x288] sm:$0xff] %v2680
    %2873 = vst [vmem:[#allocation11 + $0x290] sm:$0xff] %v2681
    %2874 = vst [vmem:[#allocation11 + $0x298] sm:$0xff] %v2682
    %2875 = vst [vmem:[#allocation11 + $0x2a0] sm:$0xff] %v2683
    %2876 = vst [vmem:[#allocation11 + $0x2a8] sm:$0xff] %v2684
    %2877 = vst [vmem:[#allocation11 + $0x2b0] sm:$0xff] %v2685
    %2878 = vst [vmem:[#allocation11 + $0x2b8] sm:$0xff] %v2686
    %2879 = vst [vmem:[#allocation11 + $0x2c0] sm:$0xff] %v2687
    %2880 = vst [vmem:[#allocation11 + $0x2c8] sm:$0xff] %v2688
    %2881 = vst [vmem:[#allocation11 + $0x2d0] sm:$0xff] %v2689
    %2882 = vst [vmem:[#allocation11 + $0x2d8] sm:$0xff] %v2690
    %2883 = vst [vmem:[#allocation11 + $0x2e0] sm:$0xff] %v2691
    %2884 = vst [vmem:[#allocation11 + $0x2e8] sm:$0xff] %v2692
    %2885 = vst [vmem:[#allocation11 + $0x2f0] sm:$0xff] %v2693
    %2886 = vst [vmem:[#allocation11 + $0x2f8] sm:$0xff] %v2694
    // Predicated region
    $region38: #{tpu_custom_call.1} parent=1 // pred_check
      _
    $region39: #{tpu_custom_call.1} parent=1 // pred_check_branch
      %2888 = sbr.rel (0) target = $region41
    $region40: #{tpu_custom_call.1} parent=1 // pred_region
      %s2890 = ssub.s32 4096, 4096
      %2891 = vsyncadd [#allocation4], %s2890
      %s2892 = sshll.u32 [#allocation10], 4
      %s2893 = int_to_ptr.vmem [resolvable:$true] %s2892
      %2898 = dma.vmem_to_hbm [thread:$0]  %s2893, 4096, %s5, [#allocation4], 128, 128, 8
    $region41: #{tpu_custom_call.1} parent=1 // pred_fallthru
      _
    // Predicated region
    $region42: #{tpu_custom_call.1} parent=1 // pred_check
      _
    $region43: #{tpu_custom_call.1} parent=1 // pred_check_branch
      %2900 = sbr.rel (0) target = $region45
    $region44: #{tpu_custom_call.1} parent=1 // pred_region
      %s2902 = ssub.s32 12288, 12288
      %2903 = vsyncadd [#allocation12], %s2902
      %s2904 = sshll.u32 [#allocation11], 4
      %s2905 = int_to_ptr.vmem [resolvable:$true] %s2904
      %2910 = dma.vmem_to_hbm [thread:$0]  %s2905, 12288, %s6, [#allocation12], 384, 384, 24
    $region45: #{tpu_custom_call.1} parent=1 // pred_fallthru
      _
    // Predicated region
    $region46: #{tpu_custom_call.1} parent=1 // pred_check
      _
    $region47: #{tpu_custom_call.1} parent=1 // pred_check_branch
      %2912 = sbr.rel (0) target = $region49
    $region48: #{tpu_custom_call.1} parent=1 // pred_region
      %2913 = dma.done [#allocation4], 4096
    $region49: #{tpu_custom_call.1} parent=1 // pred_fallthru
      _
    // Predicated region
    $region50: #{tpu_custom_call.1} parent=1 // pred_check
      _
    $region51: #{tpu_custom_call.1} parent=1 // pred_check_branch
      %2915 = sbr.rel (0) target = $region53
    $region52: #{tpu_custom_call.1} parent=1 // pred_region
      %2916 = dma.done [#allocation12], 12288
    $region53: #{tpu_custom_call.1} parent=1 // pred_fallthru
      _
    %2917 = vsyncpa [#allocation3], 1
    %2918 = vsyncpa [#allocation6], 1
    %2919 = vsyncpa [#allocation9], 1
    %2920 = vsyncpa [#allocation4], 1
    %2921 = vsyncpa [#allocation12], 1

</llo_original>
